<compile_context>
chip_gen: v7x
topology: tpu7x:2x2x1
jax: 0.10.0
libtpu: 0.0.40
codegen_flags: <defaults>
</compile_context>

<pallas_src>
import jax
import jax.numpy as jnp
from jax.experimental import pallas as pl
from jax.experimental.pallas import tpu as pltpu

# ----------------------------- model constants -----------------------------
IN_DIM = 50 * 53          # 2650 (kept unpadded end-to-end)
H1 = 128
H2 = 128
H3 = 64
OUT = 4
MAX_TM = 512              # batch tile cap (fits default 32 MiB scoped VMEM everywhere)

# Inference-branch combination coefficients (module globals in the original
# codebase); defined deterministically here.
COEFF_ENERGY = 0.5
COEFF_RESPONSE = 0.3
COEFF_BISECTOR = 0.15
COEFF_MIGRATE = 0.05


def _round_up(n, m):
    return ((n + m - 1) // m) * m


def _choose_tm(batch):
    """Batch tile: full extent for tiny batches; otherwise a multiple of 8
    chosen so the parallel batch grid has >= 2 steps (v7x has 2 TensorCores),
    capped at MAX_TM."""
    if batch <= 8:
        return batch
    tm = _round_up(-(-batch // 2), 8)   # ceil(batch/2) rounded up to 8
    return min(MAX_TM, tm)


def _softplus(z):
    # numerically stable softplus, elementwise (VPU/EUP)
    return jnp.maximum(z, 0.0) + jnp.log1p(jnp.exp(-jnp.abs(z)))


# ------------------------------- Pallas kernel ------------------------------
def _mlp_kernel(x_ref, w1_ref, b1_ref, w2_ref, b2_ref, w3_ref, b3_ref,
                w4_ref, b4_ref, coeff_ref, out_ref):
    # Layer 1: bf16 operands on the MXU, f32 accumulation.  K = 2650 (unpadded).
    x = x_ref[...].astype(jnp.bfloat16)                                  # (TM, 2650)
    h = jnp.dot(x, w1_ref[...], preferred_element_type=jnp.float32) + b1_ref[...]
    h = _softplus(h)                                                     # (TM, 128) f32

    h = jnp.dot(h, w2_ref[...], preferred_element_type=jnp.float32) + b2_ref[...]
    h = _softplus(h)                                                     # (TM, 128)

    h = jnp.dot(h, w3_ref[...], preferred_element_type=jnp.float32) + b3_ref[...]
    h = h - jnp.tanh(h)                                                  # Tanhshrink, (TM, 64)

    z = jnp.dot(h, w4_ref[...], preferred_element_type=jnp.float32) + b4_ref[...]
    s = jax.nn.sigmoid(z)                                                # (TM, 4)

    # Inference branch: 4-wide weighted combine (no 128-lane reduce).
    out_ref[...] = jnp.sum(s * coeff_ref[...], axis=-1, keepdims=True)   # (TM, 1)


# --------------------------------- wrapper -----------------------------------
@jax.jit
def energy_latency6_50_forward(x, params):
    """x: (..., 50, 53) f32.  Returns per-sample scalar(s) of the inference branch."""
    squeeze = x.ndim == 2
    xb = x.reshape(-1, IN_DIM).astype(jnp.float32)   # metadata-only reshape, no pad/copy
    B = xb.shape[0]
    TM = _choose_tm(B)
    grid = (pl.cdiv(B, TM),)                         # ragged last block handled by Pallas

    const = lambda i: (0, 0)  # weights: same block every grid step -> VMEM-resident
    out = pl.pallas_call(
        _mlp_kernel,
        out_shape=jax.ShapeDtypeStruct((B, 1), jnp.float32),
        grid=grid,
        in_specs=[
            pl.BlockSpec((TM, IN_DIM), lambda i: (i, 0)),                # x tile (full-extent K)
            pl.BlockSpec((IN_DIM, H1), const),                           # w1 (2650, 128) bf16
            pl.BlockSpec((1, H1), const),                                # b1
            pl.BlockSpec((H1, H2), const),                               # w2
            pl.BlockSpec((1, H2), const),                                # b2
            pl.BlockSpec((H2, H3), const),                               # w3 (128, 64)
            pl.BlockSpec((1, H3), const),                                # b3
            pl.BlockSpec((H3, OUT), const),                              # w4 (64, 4)
            pl.BlockSpec((1, OUT), const),                               # b4
            pl.BlockSpec((1, OUT), const),                               # coeff row
        ],
        out_specs=pl.BlockSpec((TM, 1), lambda i: (i, 0)),
        compiler_params=pltpu.CompilerParams(
            dimension_semantics=("parallel",)),                          # megacore split on v7x
    )(xb,
      params["w1"], params["b1"],
      params["w2"], params["b2"],
      params["w3"], params["b3"],
      params["w4"], params["b4"],
      params["coeff"])

    res = out[:, 0]
    return res[0] if squeeze else res


# --------------------------- parameter construction --------------------------
def init_params(key):
    """Deterministic PyTorch-style init (U(-1/sqrt(fan_in), 1/sqrt(fan_in)));
    weights stored (in, out).  w1 kept unpadded and cast to bf16."""
    ks = jax.random.split(key, 8)

    def lin(kw, kb, fan_in, fan_out):
        bound = 1.0 / jnp.sqrt(jnp.float32(fan_in))
        w = jax.random.uniform(kw, (fan_in, fan_out), jnp.float32, -bound, bound)
        b = jax.random.uniform(kb, (1, fan_out), jnp.float32, -bound, bound)
        return w, b

    w1, b1 = lin(ks[0], ks[1], IN_DIM, H1)
    w2, b2 = lin(ks[2], ks[3], H1, H2)
    w3, b3 = lin(ks[4], ks[5], H2, H3)
    w4, b4 = lin(ks[6], ks[7], H3, OUT)

    # Coefficient row built once at init (hoisted out of the per-call path).
    coeff = jnp.array(
        [[COEFF_ENERGY, COEFF_RESPONSE, COEFF_BISECTOR, COEFF_MIGRATE]], jnp.float32)

    params = dict(w1=w1.astype(jnp.bfloat16), b1=b1, w2=w2, b2=b2,
                  w3=w3, b3=b3, w4=w4, b4=b4, coeff=coeff)
    raw = dict(w1=w1, b1=b1, w2=w2, b2=b2, w3=w3, b3=b3, w4=w4, b4=b4)
    return params, raw


def reference_forward(x, raw, coeffs4):
    """Pure-JAX f32 reference of the PyTorch forward (inference branch)."""
    h = x.reshape(-1, IN_DIM).astype(jnp.float32)
    h = _softplus(h @ raw["w1"] + raw["b1"])
    h = _softplus(h @ raw["w2"] + raw["b2"])
    h = h @ raw["w3"] + raw["b3"]
    h = h - jnp.tanh(h)
    s = jax.nn.sigmoid(h @ raw["w4"] + raw["b4"])
    return s @ coeffs4


# ------------------------------------ main -----------------------------------
if __name__ == "__main__":
    key = jax.random.PRNGKey(0)
    kx, kp = jax.random.split(key)

    params, raw_params = init_params(kp)
    coeffs4 = jnp.array(
        [COEFF_ENERGY, COEFF_RESPONSE, COEFF_BISECTOR, COEFF_MIGRATE], jnp.float32)

    # TODO(synk): the original forward's train-mode branch (returns the raw
    # 4-vector when 'train' appears in argv) is argv-dependent; only the
    # inference branch (weighted scalar) is implemented here.

    # Case 1: small batch, single full-extent block (B=4, TM=4, grid=1).
    B = 4
    x = jax.random.normal(kx, (B, 50, 53), jnp.float32)
    out = jax.block_until_ready(energy_latency6_50_forward(x, params))
    ref = reference_forward(x, raw_params, coeffs4)
    assert out.shape == (B,)
    # bf16 layer-1 weights -> relaxed tolerance vs. the pure-f32 reference.
    assert jnp.allclose(out, ref, atol=1e-2, rtol=1e-2), (out, ref)

    # Case 2: ragged batch grid (B=12, TM=8, grid=2; last block overruns by 4)
    # -> validates that out-of-bounds rows of the partial block are masked.
    B2 = 12
    x2 = jax.random.normal(jax.random.PRNGKey(1), (B2, 50, 53), jnp.float32)
    out2 = jax.block_until_ready(energy_latency6_50_forward(x2, params))
    ref2 = reference_forward(x2, raw_params, coeffs4)
    assert out2.shape == (B2,)
    assert jnp.allclose(out2, ref2, atol=1e-2, rtol=1e-2), (out2, ref2)

    print("KERNEL_OK")
</pallas_src>

<mosaic_0001>
module attributes {stable_mosaic.version = 11 : i64} {
  func.func @_mlp_kernel(%arg0: i32, %arg1: memref<4x2650xf32, #tpu.memory_space<vmem>>, %arg2: memref<2650x128xbf16, #tpu.memory_space<vmem>>, %arg3: memref<1x128xf32, #tpu.memory_space<vmem>>, %arg4: memref<128x128xf32, #tpu.memory_space<vmem>>, %arg5: memref<1x128xf32, #tpu.memory_space<vmem>>, %arg6: memref<128x64xf32, #tpu.memory_space<vmem>>, %arg7: memref<1x64xf32, #tpu.memory_space<vmem>>, %arg8: memref<64x4xf32, #tpu.memory_space<vmem>>, %arg9: memref<1x4xf32, #tpu.memory_space<vmem>>, %arg10: memref<1x4xf32, #tpu.memory_space<vmem>>, %arg11: memref<4x1xf32, #tpu.memory_space<vmem>>) attributes {dimension_semantics = [#tpu.dimension_semantics<parallel>], iteration_bounds = array<i64: 1>, scalar_prefetch = 0 : i64, scratch_operands = 0 : i64, tpu.core_type = #tpu.core_type<tc>, window_params = [{transform_indices = @transform_0, window_bounds = array<i64: 4, 2650>}, {pipeline_mode = #tpu.pipeline_mode<synchronous>, transform_indices = @transform_1, window_bounds = array<i64: 2650, 128>}, {pipeline_mode = #tpu.pipeline_mode<synchronous>, transform_indices = @transform_2, window_bounds = array<i64: 1, 128>}, {pipeline_mode = #tpu.pipeline_mode<synchronous>, transform_indices = @transform_3, window_bounds = array<i64: 128, 128>}, {pipeline_mode = #tpu.pipeline_mode<synchronous>, transform_indices = @transform_4, window_bounds = array<i64: 1, 128>}, {pipeline_mode = #tpu.pipeline_mode<synchronous>, transform_indices = @transform_5, window_bounds = array<i64: 128, 64>}, {pipeline_mode = #tpu.pipeline_mode<synchronous>, transform_indices = @transform_6, window_bounds = array<i64: 1, 64>}, {pipeline_mode = #tpu.pipeline_mode<synchronous>, transform_indices = @transform_7, window_bounds = array<i64: 64, 4>}, {pipeline_mode = #tpu.pipeline_mode<synchronous>, transform_indices = @transform_8, window_bounds = array<i64: 1, 4>}, {pipeline_mode = #tpu.pipeline_mode<synchronous>, transform_indices = @transform_9, window_bounds = array<i64: 1, 4>}, {transform_indices = @transform_10, window_bounds = array<i64: 4, 1>}]} {
    %c0 = arith.constant 0 : index
    %c0_0 = arith.constant 0 : index
    %0 = vector.load %arg1[%c0, %c0_0] : memref<4x2650xf32, #tpu.memory_space<vmem>>, vector<4x2650xf32>
    %1 = arith.truncf %0 : vector<4x2650xf32> to vector<4x2650xbf16>
    %c0_1 = arith.constant 0 : index
    %c0_2 = arith.constant 0 : index
    %2 = vector.load %arg2[%c0_1, %c0_2] : memref<2650x128xbf16, #tpu.memory_space<vmem>>, vector<2650x128xbf16>
    %cst = arith.constant dense<0.000000e+00> : vector<4x128xf32>
    %3 = tpu.matmul %1, %2, %cst {dimension_numbers = #tpu.dot_dimension_numbers<[1], [0], [0], [1], [0, 0, 1, 1], [], []>} : vector<4x2650xbf16>, vector<2650x128xbf16>, vector<4x128xf32> -> vector<4x128xf32>
    %c0_3 = arith.constant 0 : index
    %c0_4 = arith.constant 0 : index
    %4 = vector.load %arg3[%c0_3, %c0_4] : memref<1x128xf32, #tpu.memory_space<vmem>>, vector<1x128xf32>
    %5 = vector.broadcast %4 : vector<1x128xf32> to vector<4x128xf32>
    %6 = arith.addf %3, %5 : vector<4x128xf32>
    %cst_5 = arith.constant 0.000000e+00 : f32
    %7 = vector.broadcast %cst_5 : f32 to vector<4x128xf32>
    %8 = arith.maximumf %6, %7 : vector<4x128xf32>
    %9 = math.absf %6 : vector<4x128xf32>
    %cst_6 = arith.constant 0.000000e+00 : f32
    %10 = vector.broadcast %cst_6 : f32 to vector<4x128xf32>
    %11 = arith.subf %10, %9 : vector<4x128xf32>
    %12 = math.exp %11 : vector<4x128xf32>
    %13 = math.log1p %12 : vector<4x128xf32>
    %14 = arith.addf %8, %13 : vector<4x128xf32>
    %c0_7 = arith.constant 0 : index
    %c0_8 = arith.constant 0 : index
    %15 = vector.load %arg4[%c0_7, %c0_8] : memref<128x128xf32, #tpu.memory_space<vmem>>, vector<128x128xf32>
    %cst_9 = arith.constant dense<0.000000e+00> : vector<4x128xf32>
    %16 = tpu.matmul %14, %15, %cst_9 {dimension_numbers = #tpu.dot_dimension_numbers<[1], [0], [0], [1], [0, 0, 1, 1], [], []>} : vector<4x128xf32>, vector<128x128xf32>, vector<4x128xf32> -> vector<4x128xf32>
    %c0_10 = arith.constant 0 : index
    %c0_11 = arith.constant 0 : index
    %17 = vector.load %arg5[%c0_10, %c0_11] : memref<1x128xf32, #tpu.memory_space<vmem>>, vector<1x128xf32>
    %18 = vector.broadcast %17 : vector<1x128xf32> to vector<4x128xf32>
    %19 = arith.addf %16, %18 : vector<4x128xf32>
    %cst_12 = arith.constant 0.000000e+00 : f32
    %20 = vector.broadcast %cst_12 : f32 to vector<4x128xf32>
    %21 = arith.maximumf %19, %20 : vector<4x128xf32>
    %22 = math.absf %19 : vector<4x128xf32>
    %cst_13 = arith.constant 0.000000e+00 : f32
    %23 = vector.broadcast %cst_13 : f32 to vector<4x128xf32>
    %24 = arith.subf %23, %22 : vector<4x128xf32>
    %25 = math.exp %24 : vector<4x128xf32>
    %26 = math.log1p %25 : vector<4x128xf32>
    %27 = arith.addf %21, %26 : vector<4x128xf32>
    %c0_14 = arith.constant 0 : index
    %c0_15 = arith.constant 0 : index
    %28 = vector.load %arg6[%c0_14, %c0_15] : memref<128x64xf32, #tpu.memory_space<vmem>>, vector<128x64xf32>
    %cst_16 = arith.constant dense<0.000000e+00> : vector<4x64xf32>
    %29 = tpu.matmul %27, %28, %cst_16 {dimension_numbers = #tpu.dot_dimension_numbers<[1], [0], [0], [1], [0, 0, 1, 1], [], []>} : vector<4x128xf32>, vector<128x64xf32>, vector<4x64xf32> -> vector<4x64xf32>
    %c0_17 = arith.constant 0 : index
    %c0_18 = arith.constant 0 : index
    %30 = vector.load %arg7[%c0_17, %c0_18] : memref<1x64xf32, #tpu.memory_space<vmem>>, vector<1x64xf32>
    %31 = vector.broadcast %30 : vector<1x64xf32> to vector<4x64xf32>
    %32 = arith.addf %29, %31 : vector<4x64xf32>
    %33 = math.tanh %32 : vector<4x64xf32>
    %34 = arith.subf %32, %33 : vector<4x64xf32>
    %c0_19 = arith.constant 0 : index
    %c0_20 = arith.constant 0 : index
    %35 = vector.load %arg8[%c0_19, %c0_20] : memref<64x4xf32, #tpu.memory_space<vmem>>, vector<64x4xf32>
    %cst_21 = arith.constant dense<0.000000e+00> : vector<4x4xf32>
    %36 = tpu.matmul %34, %35, %cst_21 {dimension_numbers = #tpu.dot_dimension_numbers<[1], [0], [0], [1], [0, 0, 1, 1], [], []>} : vector<4x64xf32>, vector<64x4xf32>, vector<4x4xf32> -> vector<4x4xf32>
    %c0_22 = arith.constant 0 : index
    %c0_23 = arith.constant 0 : index
    %37 = vector.load %arg9[%c0_22, %c0_23] : memref<1x4xf32, #tpu.memory_space<vmem>>, vector<1x4xf32>
    %38 = vector.broadcast %37 : vector<1x4xf32> to vector<4x4xf32>
    %39 = arith.addf %36, %38 : vector<4x4xf32>
    %40 = arith.negf %39 : vector<4x4xf32>
    %41 = math.exp %40 : vector<4x4xf32>
    %cst_24 = arith.constant 1.000000e+00 : f32
    %42 = vector.broadcast %cst_24 : f32 to vector<4x4xf32>
    %43 = arith.addf %42, %41 : vector<4x4xf32>
    %44 = arith.divf %42, %43 : vector<4x4xf32>
    %c0_25 = arith.constant 0 : index
    %c0_26 = arith.constant 0 : index
    %45 = vector.load %arg10[%c0_25, %c0_26] : memref<1x4xf32, #tpu.memory_space<vmem>>, vector<1x4xf32>
    %46 = vector.broadcast %45 : vector<1x4xf32> to vector<4x4xf32>
    %47 = arith.mulf %44, %46 : vector<4x4xf32>
    %cst_27 = arith.constant dense<0.000000e+00> : vector<4xf32>
    %48 = vector.multi_reduction <add>, %47, %cst_27 [1] : vector<4x4xf32> to vector<4xf32>
    %49 = vector.shape_cast %48 : vector<4xf32> to vector<4x1xf32>
    %c0_28 = arith.constant 0 : index
    %c0_29 = arith.constant 0 : index
    %50 = vector.load %arg11[%c0_28, %c0_29] : memref<4x1xf32, #tpu.memory_space<vmem>>, vector<4x1xf32>
    tpu.vector_store %arg11[%c0_28, %c0_29], %49 {strides = array<i32>} : memref<4x1xf32, #tpu.memory_space<vmem>>, vector<4x1xf32>,
    return
  }
  func.func @transform_0(%arg0: i32) -> (i32, i32) {
    %c0_i32 = arith.constant 0 : i32
    %c0_i32_0 = arith.constant 0 : i32
    return %arg0, %c0_i32 : i32, i32
  }
  func.func @transform_1(%arg0: i32) -> (i32, i32) {
    %c0_i32 = arith.constant 0 : i32
    %c0_i32_0 = arith.constant 0 : i32
    %c0_i32_1 = arith.constant 0 : i32
    return %c0_i32, %c0_i32_0 : i32, i32
  }
  func.func @transform_2(%arg0: i32) -> (i32, i32) {
    %c0_i32 = arith.constant 0 : i32
    %c0_i32_0 = arith.constant 0 : i32
    %c0_i32_1 = arith.constant 0 : i32
    return %c0_i32, %c0_i32_0 : i32, i32
  }
  func.func @transform_3(%arg0: i32) -> (i32, i32) {
    %c0_i32 = arith.constant 0 : i32
    %c0_i32_0 = arith.constant 0 : i32
    %c0_i32_1 = arith.constant 0 : i32
    return %c0_i32, %c0_i32_0 : i32, i32
  }
  func.func @transform_4(%arg0: i32) -> (i32, i32) {
    %c0_i32 = arith.constant 0 : i32
    %c0_i32_0 = arith.constant 0 : i32
    %c0_i32_1 = arith.constant 0 : i32
    return %c0_i32, %c0_i32_0 : i32, i32
  }
  func.func @transform_5(%arg0: i32) -> (i32, i32) {
    %c0_i32 = arith.constant 0 : i32
    %c0_i32_0 = arith.constant 0 : i32
    %c0_i32_1 = arith.constant 0 : i32
    return %c0_i32, %c0_i32_0 : i32, i32
  }
  func.func @transform_6(%arg0: i32) -> (i32, i32) {
    %c0_i32 = arith.constant 0 : i32
    %c0_i32_0 = arith.constant 0 : i32
    %c0_i32_1 = arith.constant 0 : i32
    return %c0_i32, %c0_i32_0 : i32, i32
  }
  func.func @transform_7(%arg0: i32) -> (i32, i32) {
    %c0_i32 = arith.constant 0 : i32
    %c0_i32_0 = arith.constant 0 : i32
    %c0_i32_1 = arith.constant 0 : i32
    return %c0_i32, %c0_i32_0 : i32, i32
  }
  func.func @transform_8(%arg0: i32) -> (i32, i32) {
    %c0_i32 = arith.constant 0 : i32
    %c0_i32_0 = arith.constant 0 : i32
    %c0_i32_1 = arith.constant 0 : i32
    return %c0_i32, %c0_i32_0 : i32, i32
  }
  func.func @transform_9(%arg0: i32) -> (i32, i32) {
    %c0_i32 = arith.constant 0 : i32
    %c0_i32_0 = arith.constant 0 : i32
    %c0_i32_1 = arith.constant 0 : i32
    return %c0_i32, %c0_i32_0 : i32, i32
  }
  func.func @transform_10(%arg0: i32) -> (i32, i32) {
    %c0_i32 = arith.constant 0 : i32
    %c0_i32_0 = arith.constant 0 : i32
    return %arg0, %c0_i32 : i32, i32
  }
}

</mosaic_0001>

<llo_original>
// kernel: energy_latency6_50_forward.1
$region0: #{energy_latency6_50_forward.1}
  #allocation0 [shape = 'u32[]', space=smem, size = 0x4, offset = 0x4, fixed_abs, tag = 'smem constant byte address 0x4 - core index']
  #allocation1 [shape = 'u32[144,128]{1,0:T(1,128)}', space=vmem, size = 0x12000, scoped, tag = 'internal scratch']
  %s0 = inlined_call_operand.vmem [shape: f32[4,2650], index: 0, kind: input, shape index: {}]
  %s1 = inlined_call_operand.hbm [shape: bf16[2650,128], index: 1, kind: input, shape index: {}]
  %s2 = inlined_call_operand.vmem [shape: f32[1,128], index: 2, kind: input, shape index: {}]
  %s3 = inlined_call_operand.vmem [shape: f32[128,128], index: 3, kind: input, shape index: {}]
  %s4 = inlined_call_operand.vmem [shape: f32[1,128], index: 4, kind: input, shape index: {}]
  %s5 = inlined_call_operand.vmem [shape: f32[128,64], index: 5, kind: input, shape index: {}]
  %s6 = inlined_call_operand.vmem [shape: f32[1,64], index: 6, kind: input, shape index: {}]
  %s7 = inlined_call_operand.vmem [shape: f32[64,4], index: 7, kind: input, shape index: {}]
  %s8 = inlined_call_operand.vmem [shape: f32[1,4], index: 8, kind: input, shape index: {}]
  %s9 = inlined_call_operand.vmem [shape: f32[1,4], index: 9, kind: input, shape index: {}]
  %s10 = inlined_call_operand.vmem [shape: f32[4,1], index: 10, kind: output, shape index: {}]
  %s11 = sld [smem:[#allocation0]]
  $region54: #{energy_latency6_50_forward.1} parent=0
    _
  %s13 = ssub.s32 1, %s11
  %s14 = scalar_select 0, %s13, %s11
  $region1: #{energy_latency6_50_forward.1} parent=0
    #allocation2 [shape = 'u8[679936]{0}', space=vmem, size = 0xa6000, scoped, tag = 'input window, operand 1, single buffered']
    #allocation3 [shape = 's32[1]{0}', space=sflag, size = 0x4, scoped, tag = 'scoped memory for energy_latency6_50_forward.1']
    %15 = vsyncpa [#allocation3], 0
    // Predicated region
    $region2: #{energy_latency6_50_forward.1} parent=1 // pred_check
      _
    $region3: #{energy_latency6_50_forward.1} parent=1 // pred_check_branch
      %17 = sbr.rel (0) target = $region5
    $region4: #{energy_latency6_50_forward.1} parent=1 // pred_region
      _
    $region5: #{energy_latency6_50_forward.1} parent=1 // pred_fallthru
      _
    // Predicated region
    $region6: #{energy_latency6_50_forward.1} parent=1 // pred_check
      _
    $region7: #{energy_latency6_50_forward.1} parent=1 // pred_check_branch
      %19 = sbr.rel (0) target = $region9
    $region8: #{energy_latency6_50_forward.1} parent=1 // pred_region
      %s21 = ssub.s32 21248, 21248
      %22 = vsyncadd [#allocation3], %s21
      %s23 = sshll.u32 [#allocation2], 4
      %s24 = int_to_ptr.vmem [resolvable:$true] %s23
      %29 = dma.hbm_to_vmem [thread:$0]  %s1, 21248, %s24, [#allocation3], 64, 64, 4
    $region9: #{energy_latency6_50_forward.1} parent=1 // pred_fallthru
      _
    // Predicated region
    $region10: #{energy_latency6_50_forward.1} parent=1 // pred_check
      _
    $region11: #{energy_latency6_50_forward.1} parent=1 // pred_check_branch
      %31 = sbr.rel (0) target = $region13
    $region12: #{energy_latency6_50_forward.1} parent=1 // pred_region
      _
    $region13: #{energy_latency6_50_forward.1} parent=1 // pred_fallthru
      _
    // Predicated region
    $region14: #{energy_latency6_50_forward.1} parent=1 // pred_check
      _
    $region15: #{energy_latency6_50_forward.1} parent=1 // pred_check_branch
      %33 = sbr.rel (0) target = $region17
    $region16: #{energy_latency6_50_forward.1} parent=1 // pred_region
      _
    $region17: #{energy_latency6_50_forward.1} parent=1 // pred_fallthru
      _
    // Predicated region
    $region18: #{energy_latency6_50_forward.1} parent=1 // pred_check
      _
    $region19: #{energy_latency6_50_forward.1} parent=1 // pred_check_branch
      %35 = sbr.rel (0) target = $region21
    $region20: #{energy_latency6_50_forward.1} parent=1 // pred_region
      _
    $region21: #{energy_latency6_50_forward.1} parent=1 // pred_fallthru
      _
    // Predicated region
    $region22: #{energy_latency6_50_forward.1} parent=1 // pred_check
      _
    $region23: #{energy_latency6_50_forward.1} parent=1 // pred_check_branch
      %37 = sbr.rel (0) target = $region25
    $region24: #{energy_latency6_50_forward.1} parent=1 // pred_region
      _
    $region25: #{energy_latency6_50_forward.1} parent=1 // pred_fallthru
      _
    // Predicated region
    $region26: #{energy_latency6_50_forward.1} parent=1 // pred_check
      _
    $region27: #{energy_latency6_50_forward.1} parent=1 // pred_check_branch
      %39 = sbr.rel (0) target = $region29
    $region28: #{energy_latency6_50_forward.1} parent=1 // pred_region
      _
    $region29: #{energy_latency6_50_forward.1} parent=1 // pred_fallthru
      _
    // Predicated region
    $region30: #{energy_latency6_50_forward.1} parent=1 // pred_check
      _
    $region31: #{energy_latency6_50_forward.1} parent=1 // pred_check_branch
      %41 = sbr.rel (0) target = $region33
    $region32: #{energy_latency6_50_forward.1} parent=1 // pred_region
      _
    $region33: #{energy_latency6_50_forward.1} parent=1 // pred_fallthru
      _
    // Predicated region
    $region34: #{energy_latency6_50_forward.1} parent=1 // pred_check
      _
    $region35: #{energy_latency6_50_forward.1} parent=1 // pred_check_branch
      %43 = sbr.rel (0) target = $region37
    $region36: #{energy_latency6_50_forward.1} parent=1 // pred_region
      _
    $region37: #{energy_latency6_50_forward.1} parent=1 // pred_fallthru
      _
    // Predicated region
    $region38: #{energy_latency6_50_forward.1} parent=1 // pred_check
      _
    $region39: #{energy_latency6_50_forward.1} parent=1 // pred_check_branch
      %45 = sbr.rel (0) target = $region41
    $region40: #{energy_latency6_50_forward.1} parent=1 // pred_region
      _
    $region41: #{energy_latency6_50_forward.1} parent=1 // pred_fallthru
      _
    // Predicated region
    $region42: #{energy_latency6_50_forward.1} parent=1 // pred_check
      _
    $region43: #{energy_latency6_50_forward.1} parent=1 // pred_check_branch
      %47 = sbr.rel (0) target = $region45
    $region44: #{energy_latency6_50_forward.1} parent=1 // pred_region
      %48 = dma.done [#allocation3], 21248
    $region45: #{energy_latency6_50_forward.1} parent=1 // pred_fallthru
      _
    %v50 = vld [vmem:[%s0] sm:$0xff]
    %v51 = vld [vmem:[%s0 + $0x8] sm:$0xff]
    %v52 = vld [vmem:[%s0 + $0x10] sm:$0xff]
    %v53 = vld [vmem:[%s0 + $0x18] sm:$0xff]
    %v54 = vld [vmem:[%s0 + $0x20] sm:$0xff]
    %v55 = vld [vmem:[%s0 + $0x28] sm:$0xff]
    %v56 = vld [vmem:[%s0 + $0x30] sm:$0xff]
    %v57 = vld [vmem:[%s0 + $0x38] sm:$0xff]
    %v58 = vld [vmem:[%s0 + $0x40] sm:$0xff]
    %v59 = vld [vmem:[%s0 + $0x48] sm:$0xff]
    %v60 = vld [vmem:[%s0 + $0x50] sm:$0xf]
    %v71 = vcombine.high %v50, %v50
    %v72 = vcombine.high %v51, %v51
    %v73 = vcombine.high %v52, %v52
    %v74 = vcombine.high %v53, %v53
    %v75 = vcombine.high %v54, %v54
    %v76 = vcombine.high %v55, %v55
    %v77 = vcombine.high %v56, %v56
    %v78 = vcombine.high %v57, %v57
    %v79 = vcombine.high %v58, %v58
    %v80 = vcombine.high %v59, %v59
    %v91 = vpack.c.bf16 %v50, %v50
    %v92 = vpack.c.bf16 %v71, %v71
    %v93 = vpack.c.bf16 %v51, %v51
    %v94 = vpack.c.bf16 %v72, %v72
    %v95 = vpack.c.bf16 %v52, %v52
    %v96 = vpack.c.bf16 %v73, %v73
    %v97 = vpack.c.bf16 %v53, %v53
    %v98 = vpack.c.bf16 %v74, %v74
    %v99 = vpack.c.bf16 %v54, %v54
    %v100 = vpack.c.bf16 %v75, %v75
    %v101 = vpack.c.bf16 %v55, %v55
    %v102 = vpack.c.bf16 %v76, %v76
    %v103 = vpack.c.bf16 %v56, %v56
    %v104 = vpack.c.bf16 %v77, %v77
    %v105 = vpack.c.bf16 %v57, %v57
    %v106 = vpack.c.bf16 %v78, %v78
    %v107 = vpack.c.bf16 %v58, %v58
    %v108 = vpack.c.bf16 %v79, %v79
    %v109 = vpack.c.bf16 %v59, %v59
    %v110 = vpack.c.bf16 %v80, %v80
    %v111 = vpack.c.bf16 %v60, %v60
    %v112 = vld [vmem:[#allocation2] sm:$0xf]
    %v113 = vld [vmem:[#allocation2 + $0x4] sm:$0xf]
    %v114 = vld [vmem:[#allocation2 + $0x8] sm:$0xf]
    %v115 = vld [vmem:[#allocation2 + $0xc] sm:$0xf]
    %v116 = vld [vmem:[#allocation2 + $0x10] sm:$0xf]
    %v117 = vld [vmem:[#allocation2 + $0x14] sm:$0xf]
    %v118 = vld [vmem:[#allocation2 + $0x18] sm:$0xf]
    %v119 = vld [vmem:[#allocation2 + $0x1c] sm:$0xf]
    %v120 = vld [vmem:[#allocation2 + $0x20] sm:$0xf]
    %v121 = vld [vmem:[#allocation2 + $0x24] sm:$0xf]
    %v122 = vld [vmem:[#allocation2 + $0x28] sm:$0xf]
    %v123 = vld [vmem:[#allocation2 + $0x2c] sm:$0xf]
    %v124 = vld [vmem:[#allocation2 + $0x30] sm:$0xf]
    %v125 = vld [vmem:[#allocation2 + $0x34] sm:$0xf]
    %v126 = vld [vmem:[#allocation2 + $0x38] sm:$0xf]
    %v127 = vld [vmem:[#allocation2 + $0x3c] sm:$0xf]
    %v128 = vld [vmem:[#allocation2 + $0x40] sm:$0xf]
    %v129 = vld [vmem:[#allocation2 + $0x44] sm:$0xf]
    %v130 = vld [vmem:[#allocation2 + $0x48] sm:$0xf]
    %v131 = vld [vmem:[#allocation2 + $0x4c] sm:$0xf]
    %v132 = vld [vmem:[#allocation2 + $0x50] sm:$0xf]
    %v133 = vld [vmem:[#allocation2 + $0x54] sm:$0xf]
    %v134 = vld [vmem:[#allocation2 + $0x58] sm:$0xf]
    %v135 = vld [vmem:[#allocation2 + $0x5c] sm:$0xf]
    %v136 = vld [vmem:[#allocation2 + $0x60] sm:$0xf]
    %v137 = vld [vmem:[#allocation2 + $0x64] sm:$0xf]
    %v138 = vld [vmem:[#allocation2 + $0x68] sm:$0xf]
    %v139 = vld [vmem:[#allocation2 + $0x6c] sm:$0xf]
    %v140 = vld [vmem:[#allocation2 + $0x70] sm:$0xf]
    %v141 = vld [vmem:[#allocation2 + $0x74] sm:$0xf]
    %v142 = vld [vmem:[#allocation2 + $0x78] sm:$0xf]
    %v143 = vld [vmem:[#allocation2 + $0x7c] sm:$0xf]
    %v144 = vld [vmem:[#allocation2 + $0x80] sm:$0xf]
    %v145 = vld [vmem:[#allocation2 + $0x84] sm:$0xf]
    %v146 = vld [vmem:[#allocation2 + $0x88] sm:$0xf]
    %v147 = vld [vmem:[#allocation2 + $0x8c] sm:$0xf]
    %v148 = vld [vmem:[#allocation2 + $0x90] sm:$0xf]
    %v149 = vld [vmem:[#allocation2 + $0x94] sm:$0xf]
    %v150 = vld [vmem:[#allocation2 + $0x98] sm:$0xf]
    %v151 = vld [vmem:[#allocation2 + $0x9c] sm:$0xf]
    %v152 = vld [vmem:[#allocation2 + $0xa0] sm:$0xf]
    %v153 = vld [vmem:[#allocation2 + $0xa4] sm:$0xf]
    %v154 = vld [vmem:[#allocation2 + $0xa8] sm:$0xf]
    %v155 = vld [vmem:[#allocation2 + $0xac] sm:$0xf]
    %v156 = vld [vmem:[#allocation2 + $0xb0] sm:$0xf]
    %v157 = vld [vmem:[#allocation2 + $0xb4] sm:$0xf]
    %v158 = vld [vmem:[#allocation2 + $0xb8] sm:$0xf]
    %v159 = vld [vmem:[#allocation2 + $0xbc] sm:$0xf]
    %v160 = vld [vmem:[#allocation2 + $0xc0] sm:$0xf]
    %v161 = vld [vmem:[#allocation2 + $0xc4] sm:$0xf]
    %v162 = vld [vmem:[#allocation2 + $0xc8] sm:$0xf]
    %v163 = vld [vmem:[#allocation2 + $0xcc] sm:$0xf]
    %v164 = vld [vmem:[#allocation2 + $0xd0] sm:$0xf]
    %v165 = vld [vmem:[#allocation2 + $0xd4] sm:$0xf]
    %v166 = vld [vmem:[#allocation2 + $0xd8] sm:$0xf]
    %v167 = vld [vmem:[#allocation2 + $0xdc] sm:$0xf]
    %v168 = vld [vmem:[#allocation2 + $0xe0] sm:$0xf]
    %v169 = vld [vmem:[#allocation2 + $0xe4] sm:$0xf]
    %v170 = vld [vmem:[#allocation2 + $0xe8] sm:$0xf]
    %v171 = vld [vmem:[#allocation2 + $0xec] sm:$0xf]
    %v172 = vld [vmem:[#allocation2 + $0xf0] sm:$0xf]
    %v173 = vld [vmem:[#allocation2 + $0xf4] sm:$0xf]
    %v174 = vld [vmem:[#allocation2 + $0xf8] sm:$0xf]
    %v175 = vld [vmem:[#allocation2 + $0xfc] sm:$0xf]
    %v176 = vld [vmem:[#allocation2 + $0x100] sm:$0xf]
    %v177 = vld [vmem:[#allocation2 + $0x104] sm:$0xf]
    %v178 = vld [vmem:[#allocation2 + $0x108] sm:$0xf]
    %v179 = vld [vmem:[#allocation2 + $0x10c] sm:$0xf]
    %v180 = vld [vmem:[#allocation2 + $0x110] sm:$0xf]
    %v181 = vld [vmem:[#allocation2 + $0x114] sm:$0xf]
    %v182 = vld [vmem:[#allocation2 + $0x118] sm:$0xf]
    %v183 = vld [vmem:[#allocation2 + $0x11c] sm:$0xf]
    %v184 = vld [vmem:[#allocation2 + $0x120] sm:$0xf]
    %v185 = vld [vmem:[#allocation2 + $0x124] sm:$0xf]
    %v186 = vld [vmem:[#allocation2 + $0x128] sm:$0xf]
    %v187 = vld [vmem:[#allocation2 + $0x12c] sm:$0xf]
    %v188 = vld [vmem:[#allocation2 + $0x130] sm:$0xf]
    %v189 = vld [vmem:[#allocation2 + $0x134] sm:$0xf]
    %v190 = vld [vmem:[#allocation2 + $0x138] sm:$0xf]
    %v191 = vld [vmem:[#allocation2 + $0x13c] sm:$0xf]
    %v192 = vld [vmem:[#allocation2 + $0x140] sm:$0xf]
    %v193 = vld [vmem:[#allocation2 + $0x144] sm:$0xf]
    %v194 = vld [vmem:[#allocation2 + $0x148] sm:$0xf]
    %v195 = vld [vmem:[#allocation2 + $0x14c] sm:$0xf]
    %v196 = vld [vmem:[#allocation2 + $0x150] sm:$0xf]
    %v197 = vld [vmem:[#allocation2 + $0x154] sm:$0xf]
    %v198 = vld [vmem:[#allocation2 + $0x158] sm:$0xf]
    %v199 = vld [vmem:[#allocation2 + $0x15c] sm:$0xf]
    %v200 = vld [vmem:[#allocation2 + $0x160] sm:$0xf]
    %v201 = vld [vmem:[#allocation2 + $0x164] sm:$0xf]
    %v202 = vld [vmem:[#allocation2 + $0x168] sm:$0xf]
    %v203 = vld [vmem:[#allocation2 + $0x16c] sm:$0xf]
    %v204 = vld [vmem:[#allocation2 + $0x170] sm:$0xf]
    %v205 = vld [vmem:[#allocation2 + $0x174] sm:$0xf]
    %v206 = vld [vmem:[#allocation2 + $0x178] sm:$0xf]
    %v207 = vld [vmem:[#allocation2 + $0x17c] sm:$0xf]
    %v208 = vld [vmem:[#allocation2 + $0x180] sm:$0xf]
    %v209 = vld [vmem:[#allocation2 + $0x184] sm:$0xf]
    %v210 = vld [vmem:[#allocation2 + $0x188] sm:$0xf]
    %v211 = vld [vmem:[#allocation2 + $0x18c] sm:$0xf]
    %v212 = vld [vmem:[#allocation2 + $0x190] sm:$0xf]
    %v213 = vld [vmem:[#allocation2 + $0x194] sm:$0xf]
    %v214 = vld [vmem:[#allocation2 + $0x198] sm:$0xf]
    %v215 = vld [vmem:[#allocation2 + $0x19c] sm:$0xf]
    %v216 = vld [vmem:[#allocation2 + $0x1a0] sm:$0xf]
    %v217 = vld [vmem:[#allocation2 + $0x1a4] sm:$0xf]
    %v218 = vld [vmem:[#allocation2 + $0x1a8] sm:$0xf]
    %v219 = vld [vmem:[#allocation2 + $0x1ac] sm:$0xf]
    %v220 = vld [vmem:[#allocation2 + $0x1b0] sm:$0xf]
    %v221 = vld [vmem:[#allocation2 + $0x1b4] sm:$0xf]
    %v222 = vld [vmem:[#allocation2 + $0x1b8] sm:$0xf]
    %v223 = vld [vmem:[#allocation2 + $0x1bc] sm:$0xf]
    %v224 = vld [vmem:[#allocation2 + $0x1c0] sm:$0xf]
    %v225 = vld [vmem:[#allocation2 + $0x1c4] sm:$0xf]
    %v226 = vld [vmem:[#allocation2 + $0x1c8] sm:$0xf]
    %v227 = vld [vmem:[#allocation2 + $0x1cc] sm:$0xf]
    %v228 = vld [vmem:[#allocation2 + $0x1d0] sm:$0xf]
    %v229 = vld [vmem:[#allocation2 + $0x1d4] sm:$0xf]
    %v230 = vld [vmem:[#allocation2 + $0x1d8] sm:$0xf]
    %v231 = vld [vmem:[#allocation2 + $0x1dc] sm:$0xf]
    %v232 = vld [vmem:[#allocation2 + $0x1e0] sm:$0xf]
    %v233 = vld [vmem:[#allocation2 + $0x1e4] sm:$0xf]
    %v234 = vld [vmem:[#allocation2 + $0x1e8] sm:$0xf]
    %v235 = vld [vmem:[#allocation2 + $0x1ec] sm:$0xf]
    %v236 = vld [vmem:[#allocation2 + $0x1f0] sm:$0xf]
    %v237 = vld [vmem:[#allocation2 + $0x1f4] sm:$0xf]
    %v238 = vld [vmem:[#allocation2 + $0x1f8] sm:$0xf]
    %v239 = vld [vmem:[#allocation2 + $0x1fc] sm:$0xf]
    %v240 = vld [vmem:[#allocation2 + $0x200] sm:$0xf]
    %v241 = vld [vmem:[#allocation2 + $0x204] sm:$0xf]
    %v242 = vld [vmem:[#allocation2 + $0x208] sm:$0xf]
    %v243 = vld [vmem:[#allocation2 + $0x20c] sm:$0xf]
    %v244 = vld [vmem:[#allocation2 + $0x210] sm:$0xf]
    %v245 = vld [vmem:[#allocation2 + $0x214] sm:$0xf]
    %v246 = vld [vmem:[#allocation2 + $0x218] sm:$0xf]
    %v247 = vld [vmem:[#allocation2 + $0x21c] sm:$0xf]
    %v248 = vld [vmem:[#allocation2 + $0x220] sm:$0xf]
    %v249 = vld [vmem:[#allocation2 + $0x224] sm:$0xf]
    %v250 = vld [vmem:[#allocation2 + $0x228] sm:$0xf]
    %v251 = vld [vmem:[#allocation2 + $0x22c] sm:$0xf]
    %v252 = vld [vmem:[#allocation2 + $0x230] sm:$0xf]
    %v253 = vld [vmem:[#allocation2 + $0x234] sm:$0xf]
    %v254 = vld [vmem:[#allocation2 + $0x238] sm:$0xf]
    %v255 = vld [vmem:[#allocation2 + $0x23c] sm:$0xf]
    %v256 = vld [vmem:[#allocation2 + $0x240] sm:$0xf]
    %v257 = vld [vmem:[#allocation2 + $0x244] sm:$0xf]
    %v258 = vld [vmem:[#allocation2 + $0x248] sm:$0xf]
    %v259 = vld [vmem:[#allocation2 + $0x24c] sm:$0xf]
    %v260 = vld [vmem:[#allocation2 + $0x250] sm:$0xf]
    %v261 = vld [vmem:[#allocation2 + $0x254] sm:$0xf]
    %v262 = vld [vmem:[#allocation2 + $0x258] sm:$0xf]
    %v263 = vld [vmem:[#allocation2 + $0x25c] sm:$0xf]
    %v264 = vld [vmem:[#allocation2 + $0x260] sm:$0xf]
    %v265 = vld [vmem:[#allocation2 + $0x264] sm:$0xf]
    %v266 = vld [vmem:[#allocation2 + $0x268] sm:$0xf]
    %v267 = vld [vmem:[#allocation2 + $0x26c] sm:$0xf]
    %v268 = vld [vmem:[#allocation2 + $0x270] sm:$0xf]
    %v269 = vld [vmem:[#allocation2 + $0x274] sm:$0xf]
    %v270 = vld [vmem:[#allocation2 + $0x278] sm:$0xf]
    %v271 = vld [vmem:[#allocation2 + $0x27c] sm:$0xf]
    %v272 = vld [vmem:[#allocation2 + $0x280] sm:$0xf]
    %v273 = vld [vmem:[#allocation2 + $0x284] sm:$0xf]
    %v274 = vld [vmem:[#allocation2 + $0x288] sm:$0xf]
    %v275 = vld [vmem:[#allocation2 + $0x28c] sm:$0xf]
    %v276 = vld [vmem:[#allocation2 + $0x290] sm:$0xf]
    %v277 = vld [vmem:[#allocation2 + $0x294] sm:$0xf]
    %v278 = vld [vmem:[#allocation2 + $0x298] sm:$0xf]
    %v279 = vld [vmem:[#allocation2 + $0x29c] sm:$0xf]
    %v280 = vld [vmem:[#allocation2 + $0x2a0] sm:$0xf]
    %v281 = vld [vmem:[#allocation2 + $0x2a4] sm:$0xf]
    %v282 = vld [vmem:[#allocation2 + $0x2a8] sm:$0xf]
    %v283 = vld [vmem:[#allocation2 + $0x2ac] sm:$0xf]
    %v284 = vld [vmem:[#allocation2 + $0x2b0] sm:$0xf]
    %v285 = vld [vmem:[#allocation2 + $0x2b4] sm:$0xf]
    %v286 = vld [vmem:[#allocation2 + $0x2b8] sm:$0xf]
    %v287 = vld [vmem:[#allocation2 + $0x2bc] sm:$0xf]
    %v288 = vld [vmem:[#allocation2 + $0x2c0] sm:$0xf]
    %v289 = vld [vmem:[#allocation2 + $0x2c4] sm:$0xf]
    %v290 = vld [vmem:[#allocation2 + $0x2c8] sm:$0xf]
    %v291 = vld [vmem:[#allocation2 + $0x2cc] sm:$0xf]
    %v292 = vld [vmem:[#allocation2 + $0x2d0] sm:$0xf]
    %v293 = vld [vmem:[#allocation2 + $0x2d4] sm:$0xf]
    %v294 = vld [vmem:[#allocation2 + $0x2d8] sm:$0xf]
    %v295 = vld [vmem:[#allocation2 + $0x2dc] sm:$0xf]
    %v296 = vld [vmem:[#allocation2 + $0x2e0] sm:$0xf]
    %v297 = vld [vmem:[#allocation2 + $0x2e4] sm:$0xf]
    %v298 = vld [vmem:[#allocation2 + $0x2e8] sm:$0xf]
    %v299 = vld [vmem:[#allocation2 + $0x2ec] sm:$0xf]
    %v300 = vld [vmem:[#allocation2 + $0x2f0] sm:$0xf]
    %v301 = vld [vmem:[#allocation2 + $0x2f4] sm:$0xf]
    %v302 = vld [vmem:[#allocation2 + $0x2f8] sm:$0xf]
    %v303 = vld [vmem:[#allocation2 + $0x2fc] sm:$0xf]
    %v304 = vld [vmem:[#allocation2 + $0x300] sm:$0xf]
    %v305 = vld [vmem:[#allocation2 + $0x304] sm:$0xf]
    %v306 = vld [vmem:[#allocation2 + $0x308] sm:$0xf]
    %v307 = vld [vmem:[#allocation2 + $0x30c] sm:$0xf]
    %v308 = vld [vmem:[#allocation2 + $0x310] sm:$0xf]
    %v309 = vld [vmem:[#allocation2 + $0x314] sm:$0xf]
    %v310 = vld [vmem:[#allocation2 + $0x318] sm:$0xf]
    %v311 = vld [vmem:[#allocation2 + $0x31c] sm:$0xf]
    %v312 = vld [vmem:[#allocation2 + $0x320] sm:$0xf]
    %v313 = vld [vmem:[#allocation2 + $0x324] sm:$0xf]
    %v314 = vld [vmem:[#allocation2 + $0x328] sm:$0xf]
    %v315 = vld [vmem:[#allocation2 + $0x32c] sm:$0xf]
    %v316 = vld [vmem:[#allocation2 + $0x330] sm:$0xf]
    %v317 = vld [vmem:[#allocation2 + $0x334] sm:$0xf]
    %v318 = vld [vmem:[#allocation2 + $0x338] sm:$0xf]
    %v319 = vld [vmem:[#allocation2 + $0x33c] sm:$0xf]
    %v320 = vld [vmem:[#allocation2 + $0x340] sm:$0xf]
    %v321 = vld [vmem:[#allocation2 + $0x344] sm:$0xf]
    %v322 = vld [vmem:[#allocation2 + $0x348] sm:$0xf]
    %v323 = vld [vmem:[#allocation2 + $0x34c] sm:$0xf]
    %v324 = vld [vmem:[#allocation2 + $0x350] sm:$0xf]
    %v325 = vld [vmem:[#allocation2 + $0x354] sm:$0xf]
    %v326 = vld [vmem:[#allocation2 + $0x358] sm:$0xf]
    %v327 = vld [vmem:[#allocation2 + $0x35c] sm:$0xf]
    %v328 = vld [vmem:[#allocation2 + $0x360] sm:$0xf]
    %v329 = vld [vmem:[#allocation2 + $0x364] sm:$0xf]
    %v330 = vld [vmem:[#allocation2 + $0x368] sm:$0xf]
    %v331 = vld [vmem:[#allocation2 + $0x36c] sm:$0xf]
    %v332 = vld [vmem:[#allocation2 + $0x370] sm:$0xf]
    %v333 = vld [vmem:[#allocation2 + $0x374] sm:$0xf]
    %v334 = vld [vmem:[#allocation2 + $0x378] sm:$0xf]
    %v335 = vld [vmem:[#allocation2 + $0x37c] sm:$0xf]
    %v336 = vld [vmem:[#allocation2 + $0x380] sm:$0xf]
    %v337 = vld [vmem:[#allocation2 + $0x384] sm:$0xf]
    %v338 = vld [vmem:[#allocation2 + $0x388] sm:$0xf]
    %v339 = vld [vmem:[#allocation2 + $0x38c] sm:$0xf]
    %v340 = vld [vmem:[#allocation2 + $0x390] sm:$0xf]
    %v341 = vld [vmem:[#allocation2 + $0x394] sm:$0xf]
    %v342 = vld [vmem:[#allocation2 + $0x398] sm:$0xf]
    %v343 = vld [vmem:[#allocation2 + $0x39c] sm:$0xf]
    %v344 = vld [vmem:[#allocation2 + $0x3a0] sm:$0xf]
    %v345 = vld [vmem:[#allocation2 + $0x3a4] sm:$0xf]
    %v346 = vld [vmem:[#allocation2 + $0x3a8] sm:$0xf]
    %v347 = vld [vmem:[#allocation2 + $0x3ac] sm:$0xf]
    %v348 = vld [vmem:[#allocation2 + $0x3b0] sm:$0xf]
    %v349 = vld [vmem:[#allocation2 + $0x3b4] sm:$0xf]
    %v350 = vld [vmem:[#allocation2 + $0x3b8] sm:$0xf]
    %v351 = vld [vmem:[#allocation2 + $0x3bc] sm:$0xf]
    %v352 = vld [vmem:[#allocation2 + $0x3c0] sm:$0xf]
    %v353 = vld [vmem:[#allocation2 + $0x3c4] sm:$0xf]
    %v354 = vld [vmem:[#allocation2 + $0x3c8] sm:$0xf]
    %v355 = vld [vmem:[#allocation2 + $0x3cc] sm:$0xf]
    %v356 = vld [vmem:[#allocation2 + $0x3d0] sm:$0xf]
    %v357 = vld [vmem:[#allocation2 + $0x3d4] sm:$0xf]
    %v358 = vld [vmem:[#allocation2 + $0x3d8] sm:$0xf]
    %v359 = vld [vmem:[#allocation2 + $0x3dc] sm:$0xf]
    %v360 = vld [vmem:[#allocation2 + $0x3e0] sm:$0xf]
    %v361 = vld [vmem:[#allocation2 + $0x3e4] sm:$0xf]
    %v362 = vld [vmem:[#allocation2 + $0x3e8] sm:$0xf]
    %v363 = vld [vmem:[#allocation2 + $0x3ec] sm:$0xf]
    %v364 = vld [vmem:[#allocation2 + $0x3f0] sm:$0xf]
    %v365 = vld [vmem:[#allocation2 + $0x3f4] sm:$0xf]
    %v366 = vld [vmem:[#allocation2 + $0x3f8] sm:$0xf]
    %v367 = vld [vmem:[#allocation2 + $0x3fc] sm:$0xf]
    %v368 = vld [vmem:[#allocation2 + $0x400] sm:$0xf]
    %v369 = vld [vmem:[#allocation2 + $0x404] sm:$0xf]
    %v370 = vld [vmem:[#allocation2 + $0x408] sm:$0xf]
    %v371 = vld [vmem:[#allocation2 + $0x40c] sm:$0xf]
    %v372 = vld [vmem:[#allocation2 + $0x410] sm:$0xf]
    %v373 = vld [vmem:[#allocation2 + $0x414] sm:$0xf]
    %v374 = vld [vmem:[#allocation2 + $0x418] sm:$0xf]
    %v375 = vld [vmem:[#allocation2 + $0x41c] sm:$0xf]
    %v376 = vld [vmem:[#allocation2 + $0x420] sm:$0xf]
    %v377 = vld [vmem:[#allocation2 + $0x424] sm:$0xf]
    %v378 = vld [vmem:[#allocation2 + $0x428] sm:$0xf]
    %v379 = vld [vmem:[#allocation2 + $0x42c] sm:$0xf]
    %v380 = vld [vmem:[#allocation2 + $0x430] sm:$0xf]
    %v381 = vld [vmem:[#allocation2 + $0x434] sm:$0xf]
    %v382 = vld [vmem:[#allocation2 + $0x438] sm:$0xf]
    %v383 = vld [vmem:[#allocation2 + $0x43c] sm:$0xf]
    %v384 = vld [vmem:[#allocation2 + $0x440] sm:$0xf]
    %v385 = vld [vmem:[#allocation2 + $0x444] sm:$0xf]
    %v386 = vld [vmem:[#allocation2 + $0x448] sm:$0xf]
    %v387 = vld [vmem:[#allocation2 + $0x44c] sm:$0xf]
    %v388 = vld [vmem:[#allocation2 + $0x450] sm:$0xf]
    %v389 = vld [vmem:[#allocation2 + $0x454] sm:$0xf]
    %v390 = vld [vmem:[#allocation2 + $0x458] sm:$0xf]
    %v391 = vld [vmem:[#allocation2 + $0x45c] sm:$0xf]
    %v392 = vld [vmem:[#allocation2 + $0x460] sm:$0xf]
    %v393 = vld [vmem:[#allocation2 + $0x464] sm:$0xf]
    %v394 = vld [vmem:[#allocation2 + $0x468] sm:$0xf]
    %v395 = vld [vmem:[#allocation2 + $0x46c] sm:$0xf]
    %v396 = vld [vmem:[#allocation2 + $0x470] sm:$0xf]
    %v397 = vld [vmem:[#allocation2 + $0x474] sm:$0xf]
    %v398 = vld [vmem:[#allocation2 + $0x478] sm:$0xf]
    %v399 = vld [vmem:[#allocation2 + $0x47c] sm:$0xf]
    %v400 = vld [vmem:[#allocation2 + $0x480] sm:$0xf]
    %v401 = vld [vmem:[#allocation2 + $0x484] sm:$0xf]
    %v402 = vld [vmem:[#allocation2 + $0x488] sm:$0xf]
    %v403 = vld [vmem:[#allocation2 + $0x48c] sm:$0xf]
    %v404 = vld [vmem:[#allocation2 + $0x490] sm:$0xf]
    %v405 = vld [vmem:[#allocation2 + $0x494] sm:$0xf]
    %v406 = vld [vmem:[#allocation2 + $0x498] sm:$0xf]
    %v407 = vld [vmem:[#allocation2 + $0x49c] sm:$0xf]
    %v408 = vld [vmem:[#allocation2 + $0x4a0] sm:$0xf]
    %v409 = vld [vmem:[#allocation2 + $0x4a4] sm:$0xf]
    %v410 = vld [vmem:[#allocation2 + $0x4a8] sm:$0xf]
    %v411 = vld [vmem:[#allocation2 + $0x4ac] sm:$0xf]
    %v412 = vld [vmem:[#allocation2 + $0x4b0] sm:$0xf]
    %v413 = vld [vmem:[#allocation2 + $0x4b4] sm:$0xf]
    %v414 = vld [vmem:[#allocation2 + $0x4b8] sm:$0xf]
    %v415 = vld [vmem:[#allocation2 + $0x4bc] sm:$0xf]
    %v416 = vld [vmem:[#allocation2 + $0x4c0] sm:$0xf]
    %v417 = vld [vmem:[#allocation2 + $0x4c4] sm:$0xf]
    %v418 = vld [vmem:[#allocation2 + $0x4c8] sm:$0xf]
    %v419 = vld [vmem:[#allocation2 + $0x4cc] sm:$0xf]
    %v420 = vld [vmem:[#allocation2 + $0x4d0] sm:$0xf]
    %v421 = vld [vmem:[#allocation2 + $0x4d4] sm:$0xf]
    %v422 = vld [vmem:[#allocation2 + $0x4d8] sm:$0xf]
    %v423 = vld [vmem:[#allocation2 + $0x4dc] sm:$0xf]
    %v424 = vld [vmem:[#allocation2 + $0x4e0] sm:$0xf]
    %v425 = vld [vmem:[#allocation2 + $0x4e4] sm:$0xf]
    %v426 = vld [vmem:[#allocation2 + $0x4e8] sm:$0xf]
    %v427 = vld [vmem:[#allocation2 + $0x4ec] sm:$0xf]
    %v428 = vld [vmem:[#allocation2 + $0x4f0] sm:$0xf]
    %v429 = vld [vmem:[#allocation2 + $0x4f4] sm:$0xf]
    %v430 = vld [vmem:[#allocation2 + $0x4f8] sm:$0xf]
    %v431 = vld [vmem:[#allocation2 + $0x4fc] sm:$0xf]
    %v432 = vld [vmem:[#allocation2 + $0x500] sm:$0xf]
    %v433 = vld [vmem:[#allocation2 + $0x504] sm:$0xf]
    %v434 = vld [vmem:[#allocation2 + $0x508] sm:$0xf]
    %v435 = vld [vmem:[#allocation2 + $0x50c] sm:$0xf]
    %v436 = vld [vmem:[#allocation2 + $0x510] sm:$0xf]
    %v437 = vld [vmem:[#allocation2 + $0x514] sm:$0xf]
    %v438 = vld [vmem:[#allocation2 + $0x518] sm:$0xf]
    %v439 = vld [vmem:[#allocation2 + $0x51c] sm:$0xf]
    %v440 = vld [vmem:[#allocation2 + $0x520] sm:$0xf]
    %v441 = vld [vmem:[#allocation2 + $0x524] sm:$0xf]
    %v442 = vld [vmem:[#allocation2 + $0x528] sm:$0xf]
    %v443 = vld [vmem:[#allocation2 + $0x52c] sm:$0x1]
    %v444 = vld [vmem:[%s2] sm:$0x1]
    %v446 = vlaneseq
    %v447 = vshrl.u32 %v446, 7
    %v448 = vsub.s32 0, %v447
    %v449 = vrot.slane %v444, %v448
    %v783 = vunpack.c.l.b16 %v112
    %v784 = vunpack.c.l.b16 %v113
    %v785 = vunpack.c.l.b16 %v114
    %v786 = vunpack.c.l.b16 %v115
    %v787 = vunpack.c.l.b16 %v116
    %v788 = vunpack.c.l.b16 %v117
    %v789 = vunpack.c.l.b16 %v118
    %v790 = vunpack.c.l.b16 %v119
    %v791 = vunpack.c.l.b16 %v120
    %v792 = vunpack.c.l.b16 %v121
    %v793 = vunpack.c.l.b16 %v122
    %v794 = vunpack.c.l.b16 %v123
    %v795 = vunpack.c.l.b16 %v124
    %v796 = vunpack.c.l.b16 %v125
    %v797 = vunpack.c.l.b16 %v126
    %v798 = vunpack.c.l.b16 %v127
    %v799 = vunpack.c.l.b16 %v128
    %v800 = vunpack.c.l.b16 %v129
    %v801 = vunpack.c.l.b16 %v130
    %v802 = vunpack.c.l.b16 %v131
    %v803 = vunpack.c.l.b16 %v132
    %v804 = vunpack.c.l.b16 %v133
    %v805 = vunpack.c.l.b16 %v134
    %v806 = vunpack.c.l.b16 %v135
    %v807 = vunpack.c.l.b16 %v136
    %v808 = vunpack.c.l.b16 %v137
    %v809 = vunpack.c.l.b16 %v138
    %v810 = vunpack.c.l.b16 %v139
    %v811 = vunpack.c.l.b16 %v140
    %v812 = vunpack.c.l.b16 %v141
    %v813 = vunpack.c.l.b16 %v142
    %v814 = vunpack.c.l.b16 %v143
    %v815 = vunpack.c.l.b16 %v144
    %v816 = vunpack.c.l.b16 %v145
    %v817 = vunpack.c.l.b16 %v146
    %v818 = vunpack.c.l.b16 %v147
    %v819 = vunpack.c.l.b16 %v148
    %v820 = vunpack.c.l.b16 %v149
    %v821 = vunpack.c.l.b16 %v150
    %v822 = vunpack.c.l.b16 %v151
    %v823 = vunpack.c.l.b16 %v152
    %v824 = vunpack.c.l.b16 %v153
    %v825 = vunpack.c.l.b16 %v154
    %v826 = vunpack.c.l.b16 %v155
    %v827 = vunpack.c.l.b16 %v156
    %v828 = vunpack.c.l.b16 %v157
    %v829 = vunpack.c.l.b16 %v158
    %v830 = vunpack.c.l.b16 %v159
    %v831 = vunpack.c.l.b16 %v160
    %v832 = vunpack.c.l.b16 %v161
    %v833 = vunpack.c.l.b16 %v162
    %v834 = vunpack.c.l.b16 %v163
    %v835 = vunpack.c.l.b16 %v164
    %v836 = vunpack.c.l.b16 %v165
    %v837 = vunpack.c.l.b16 %v166
    %v838 = vunpack.c.l.b16 %v167
    %v839 = vunpack.c.l.b16 %v168
    %v840 = vunpack.c.l.b16 %v169
    %v841 = vunpack.c.l.b16 %v170
    %v842 = vunpack.c.l.b16 %v171
    %v843 = vunpack.c.l.b16 %v172
    %v844 = vunpack.c.l.b16 %v173
    %v845 = vunpack.c.l.b16 %v174
    %v846 = vunpack.c.l.b16 %v175
    %v847 = vunpack.c.l.b16 %v176
    %v848 = vunpack.c.l.b16 %v177
    %v849 = vunpack.c.l.b16 %v178
    %v850 = vunpack.c.l.b16 %v179
    %v851 = vunpack.c.l.b16 %v180
    %v852 = vunpack.c.l.b16 %v181
    %v853 = vunpack.c.l.b16 %v182
    %v854 = vunpack.c.l.b16 %v183
    %v855 = vunpack.c.l.b16 %v184
    %v856 = vunpack.c.l.b16 %v185
    %v857 = vunpack.c.l.b16 %v186
    %v858 = vunpack.c.l.b16 %v187
    %v859 = vunpack.c.l.b16 %v188
    %v860 = vunpack.c.l.b16 %v189
    %v861 = vunpack.c.l.b16 %v190
    %v862 = vunpack.c.l.b16 %v191
    %v863 = vunpack.c.l.b16 %v192
    %v864 = vunpack.c.l.b16 %v193
    %v865 = vunpack.c.l.b16 %v194
    %v866 = vunpack.c.l.b16 %v195
    %v867 = vunpack.c.l.b16 %v196
    %v868 = vunpack.c.l.b16 %v197
    %v869 = vunpack.c.l.b16 %v198
    %v870 = vunpack.c.l.b16 %v199
    %v871 = vunpack.c.l.b16 %v200
    %v872 = vunpack.c.l.b16 %v201
    %v873 = vunpack.c.l.b16 %v202
    %v874 = vunpack.c.l.b16 %v203
    %v875 = vunpack.c.l.b16 %v204
    %v876 = vunpack.c.l.b16 %v205
    %v877 = vunpack.c.l.b16 %v206
    %v878 = vunpack.c.l.b16 %v207
    %v879 = vunpack.c.l.b16 %v208
    %v880 = vunpack.c.l.b16 %v209
    %v881 = vunpack.c.l.b16 %v210
    %v882 = vunpack.c.l.b16 %v211
    %v883 = vunpack.c.l.b16 %v212
    %v884 = vunpack.c.l.b16 %v213
    %v885 = vunpack.c.l.b16 %v214
    %v886 = vunpack.c.l.b16 %v215
    %v887 = vunpack.c.l.b16 %v216
    %v888 = vunpack.c.l.b16 %v217
    %v889 = vunpack.c.l.b16 %v218
    %v890 = vunpack.c.l.b16 %v219
    %v891 = vunpack.c.l.b16 %v220
    %v892 = vunpack.c.l.b16 %v221
    %v893 = vunpack.c.l.b16 %v222
    %v894 = vunpack.c.l.b16 %v223
    %v895 = vunpack.c.l.b16 %v224
    %v896 = vunpack.c.l.b16 %v225
    %v897 = vunpack.c.l.b16 %v226
    %v898 = vunpack.c.l.b16 %v227
    %v899 = vunpack.c.l.b16 %v228
    %v900 = vunpack.c.l.b16 %v229
    %v901 = vunpack.c.l.b16 %v230
    %v902 = vunpack.c.l.b16 %v231
    %v903 = vunpack.c.l.b16 %v232
    %v904 = vunpack.c.l.b16 %v233
    %v905 = vunpack.c.l.b16 %v234
    %v906 = vunpack.c.l.b16 %v235
    %v907 = vunpack.c.l.b16 %v236
    %v908 = vunpack.c.l.b16 %v237
    %v909 = vunpack.c.l.b16 %v238
    %v910 = vunpack.c.l.b16 %v239
    %v911 = vunpack.c.l.b16 %v240
    %v912 = vunpack.c.l.b16 %v241
    %v913 = vunpack.c.l.b16 %v242
    %v914 = vunpack.c.l.b16 %v243
    %v915 = vunpack.c.l.b16 %v244
    %v916 = vunpack.c.l.b16 %v245
    %v917 = vunpack.c.l.b16 %v246
    %v918 = vunpack.c.l.b16 %v247
    %v919 = vunpack.c.l.b16 %v248
    %v920 = vunpack.c.l.b16 %v249
    %v921 = vunpack.c.l.b16 %v250
    %v922 = vunpack.c.l.b16 %v251
    %v923 = vunpack.c.l.b16 %v252
    %v924 = vunpack.c.l.b16 %v253
    %v925 = vunpack.c.l.b16 %v254
    %v926 = vunpack.c.l.b16 %v255
    %v927 = vunpack.c.l.b16 %v256
    %v928 = vunpack.c.l.b16 %v257
    %v929 = vunpack.c.l.b16 %v258
    %v930 = vunpack.c.l.b16 %v259
    %v931 = vunpack.c.l.b16 %v260
    %v932 = vunpack.c.l.b16 %v261
    %v933 = vunpack.c.l.b16 %v262
    %v934 = vunpack.c.l.b16 %v263
    %v935 = vunpack.c.l.b16 %v264
    %v936 = vunpack.c.l.b16 %v265
    %v937 = vunpack.c.l.b16 %v266
    %v938 = vunpack.c.l.b16 %v267
    %v939 = vunpack.c.l.b16 %v268
    %v940 = vunpack.c.l.b16 %v269
    %v941 = vunpack.c.l.b16 %v270
    %v942 = vunpack.c.l.b16 %v271
    %v943 = vunpack.c.l.b16 %v272
    %v944 = vunpack.c.l.b16 %v273
    %v945 = vunpack.c.l.b16 %v274
    %v946 = vunpack.c.l.b16 %v275
    %v947 = vunpack.c.l.b16 %v276
    %v948 = vunpack.c.l.b16 %v277
    %v949 = vunpack.c.l.b16 %v278
    %v950 = vunpack.c.l.b16 %v279
    %v951 = vunpack.c.l.b16 %v280
    %v952 = vunpack.c.l.b16 %v281
    %v953 = vunpack.c.l.b16 %v282
    %v954 = vunpack.c.l.b16 %v283
    %v955 = vunpack.c.l.b16 %v284
    %v956 = vunpack.c.l.b16 %v285
    %v957 = vunpack.c.l.b16 %v286
    %v958 = vunpack.c.l.b16 %v287
    %v959 = vunpack.c.l.b16 %v288
    %v960 = vunpack.c.l.b16 %v289
    %v961 = vunpack.c.l.b16 %v290
    %v962 = vunpack.c.l.b16 %v291
    %v963 = vunpack.c.l.b16 %v292
    %v964 = vunpack.c.l.b16 %v293
    %v965 = vunpack.c.l.b16 %v294
    %v966 = vunpack.c.l.b16 %v295
    %v967 = vunpack.c.l.b16 %v296
    %v968 = vunpack.c.l.b16 %v297
    %v969 = vunpack.c.l.b16 %v298
    %v970 = vunpack.c.l.b16 %v299
    %v971 = vunpack.c.l.b16 %v300
    %v972 = vunpack.c.l.b16 %v301
    %v973 = vunpack.c.l.b16 %v302
    %v974 = vunpack.c.l.b16 %v303
    %v975 = vunpack.c.l.b16 %v304
    %v976 = vunpack.c.l.b16 %v305
    %v977 = vunpack.c.l.b16 %v306
    %v978 = vunpack.c.l.b16 %v307
    %v979 = vunpack.c.l.b16 %v308
    %v980 = vunpack.c.l.b16 %v309
    %v981 = vunpack.c.l.b16 %v310
    %v982 = vunpack.c.l.b16 %v311
    %v983 = vunpack.c.l.b16 %v312
    %v984 = vunpack.c.l.b16 %v313
    %v985 = vunpack.c.l.b16 %v314
    %v986 = vunpack.c.l.b16 %v315
    %v987 = vunpack.c.l.b16 %v316
    %v988 = vunpack.c.l.b16 %v317
    %v989 = vunpack.c.l.b16 %v318
    %v990 = vunpack.c.l.b16 %v319
    %v991 = vunpack.c.l.b16 %v320
    %v992 = vunpack.c.l.b16 %v321
    %v993 = vunpack.c.l.b16 %v322
    %v994 = vunpack.c.l.b16 %v323
    %v995 = vunpack.c.l.b16 %v324
    %v996 = vunpack.c.l.b16 %v325
    %v997 = vunpack.c.l.b16 %v326
    %v998 = vunpack.c.l.b16 %v327
    %v999 = vunpack.c.l.b16 %v328
    %v1000 = vunpack.c.l.b16 %v329
    %v1001 = vunpack.c.l.b16 %v330
    %v1002 = vunpack.c.l.b16 %v331
    %v1003 = vunpack.c.l.b16 %v332
    %v1004 = vunpack.c.l.b16 %v333
    %v1005 = vunpack.c.l.b16 %v334
    %v1006 = vunpack.c.l.b16 %v335
    %v1007 = vunpack.c.l.b16 %v336
    %v1008 = vunpack.c.l.b16 %v337
    %v1009 = vunpack.c.l.b16 %v338
    %v1010 = vunpack.c.l.b16 %v339
    %v1011 = vunpack.c.l.b16 %v340
    %v1012 = vunpack.c.l.b16 %v341
    %v1013 = vunpack.c.l.b16 %v342
    %v1014 = vunpack.c.l.b16 %v343
    %v1015 = vunpack.c.l.b16 %v344
    %v1016 = vunpack.c.l.b16 %v345
    %v1017 = vunpack.c.l.b16 %v346
    %v1018 = vunpack.c.l.b16 %v347
    %v1019 = vunpack.c.l.b16 %v348
    %v1020 = vunpack.c.l.b16 %v349
    %v1021 = vunpack.c.l.b16 %v350
    %v1022 = vunpack.c.l.b16 %v351
    %v1023 = vunpack.c.l.b16 %v352
    %v1024 = vunpack.c.l.b16 %v353
    %v1025 = vunpack.c.l.b16 %v354
    %v1026 = vunpack.c.l.b16 %v355
    %v1027 = vunpack.c.l.b16 %v356
    %v1028 = vunpack.c.l.b16 %v357
    %v1029 = vunpack.c.l.b16 %v358
    %v1030 = vunpack.c.l.b16 %v359
    %v1031 = vunpack.c.l.b16 %v360
    %v1032 = vunpack.c.l.b16 %v361
    %v1033 = vunpack.c.l.b16 %v362
    %v1034 = vunpack.c.l.b16 %v363
    %v1035 = vunpack.c.l.b16 %v364
    %v1036 = vunpack.c.l.b16 %v365
    %v1037 = vunpack.c.l.b16 %v366
    %v1038 = vunpack.c.l.b16 %v367
    %v1039 = vunpack.c.l.b16 %v368
    %v1040 = vunpack.c.l.b16 %v369
    %v1041 = vunpack.c.l.b16 %v370
    %v1042 = vunpack.c.l.b16 %v371
    %v1043 = vunpack.c.l.b16 %v372
    %v1044 = vunpack.c.l.b16 %v373
    %v1045 = vunpack.c.l.b16 %v374
    %v1046 = vunpack.c.l.b16 %v375
    %v1047 = vunpack.c.l.b16 %v376
    %v1048 = vunpack.c.l.b16 %v377
    %v1049 = vunpack.c.l.b16 %v378
    %v1050 = vunpack.c.l.b16 %v379
    %v1051 = vunpack.c.l.b16 %v380
    %v1052 = vunpack.c.l.b16 %v381
    %v1053 = vunpack.c.l.b16 %v382
    %v1054 = vunpack.c.l.b16 %v383
    %v1055 = vunpack.c.l.b16 %v384
    %v1056 = vunpack.c.l.b16 %v385
    %v1057 = vunpack.c.l.b16 %v386
    %v1058 = vunpack.c.l.b16 %v387
    %v1059 = vunpack.c.l.b16 %v388
    %v1060 = vunpack.c.l.b16 %v389
    %v1061 = vunpack.c.l.b16 %v390
    %v1062 = vunpack.c.l.b16 %v391
    %v1063 = vunpack.c.l.b16 %v392
    %v1064 = vunpack.c.l.b16 %v393
    %v1065 = vunpack.c.l.b16 %v394
    %v1066 = vunpack.c.l.b16 %v395
    %v1067 = vunpack.c.l.b16 %v396
    %v1068 = vunpack.c.l.b16 %v397
    %v1069 = vunpack.c.l.b16 %v398
    %v1070 = vunpack.c.l.b16 %v399
    %v1071 = vunpack.c.l.b16 %v400
    %v1072 = vunpack.c.l.b16 %v401
    %v1073 = vunpack.c.l.b16 %v402
    %v1074 = vunpack.c.l.b16 %v403
    %v1075 = vunpack.c.l.b16 %v404
    %v1076 = vunpack.c.l.b16 %v405
    %v1077 = vunpack.c.l.b16 %v406
    %v1078 = vunpack.c.l.b16 %v407
    %v1079 = vunpack.c.l.b16 %v408
    %v1080 = vunpack.c.l.b16 %v409
    %v1081 = vunpack.c.l.b16 %v410
    %v1082 = vunpack.c.l.b16 %v411
    %v1083 = vunpack.c.l.b16 %v412
    %v1084 = vunpack.c.l.b16 %v413
    %v1085 = vunpack.c.l.b16 %v414
    %v1086 = vunpack.c.l.b16 %v415
    %v1087 = vunpack.c.l.b16 %v416
    %v1088 = vunpack.c.l.b16 %v417
    %v1089 = vunpack.c.l.b16 %v418
    %v1090 = vunpack.c.l.b16 %v419
    %v1091 = vunpack.c.l.b16 %v420
    %v1092 = vunpack.c.l.b16 %v421
    %v1093 = vunpack.c.l.b16 %v422
    %v1094 = vunpack.c.l.b16 %v423
    %v1095 = vunpack.c.l.b16 %v424
    %v1096 = vunpack.c.l.b16 %v425
    %v1097 = vunpack.c.l.b16 %v426
    %v1098 = vunpack.c.l.b16 %v427
    %v1099 = vunpack.c.l.b16 %v428
    %v1100 = vunpack.c.l.b16 %v429
    %v1101 = vunpack.c.l.b16 %v430
    %v1102 = vunpack.c.l.b16 %v431
    %v1103 = vunpack.c.l.b16 %v432
    %v1104 = vunpack.c.l.b16 %v433
    %v1105 = vunpack.c.l.b16 %v434
    %v1106 = vunpack.c.l.b16 %v435
    %v1107 = vunpack.c.l.b16 %v436
    %v1108 = vunpack.c.l.b16 %v437
    %v1109 = vunpack.c.l.b16 %v438
    %v1110 = vunpack.c.l.b16 %v439
    %v1111 = vunpack.c.l.b16 %v440
    %v1112 = vunpack.c.l.b16 %v441
    %v1113 = vunpack.c.l.b16 %v442
    %v1114 = vunpack.c.l.b16 %v443
    %v1115 = vpack.c.b16 %v784, %v783
    %v1116 = vpack.c.b16 %v786, %v785
    %v1117 = vpack.c.b16 %v788, %v787
    %v1118 = vpack.c.b16 %v790, %v789
    %v1119 = vpack.c.b16 %v792, %v791
    %v1120 = vpack.c.b16 %v794, %v793
    %v1121 = vpack.c.b16 %v796, %v795
    %v1122 = vpack.c.b16 %v798, %v797
    %v1123 = vpack.c.b16 %v800, %v799
    %v1124 = vpack.c.b16 %v802, %v801
    %v1125 = vpack.c.b16 %v804, %v803
    %v1126 = vpack.c.b16 %v806, %v805
    %v1127 = vpack.c.b16 %v808, %v807
    %v1128 = vpack.c.b16 %v810, %v809
    %v1129 = vpack.c.b16 %v812, %v811
    %v1130 = vpack.c.b16 %v814, %v813
    %v1131 = vpack.c.b16 %v816, %v815
    %v1132 = vpack.c.b16 %v818, %v817
    %v1133 = vpack.c.b16 %v820, %v819
    %v1134 = vpack.c.b16 %v822, %v821
    %v1135 = vpack.c.b16 %v824, %v823
    %v1136 = vpack.c.b16 %v826, %v825
    %v1137 = vpack.c.b16 %v828, %v827
    %v1138 = vpack.c.b16 %v830, %v829
    %v1139 = vpack.c.b16 %v832, %v831
    %v1140 = vpack.c.b16 %v834, %v833
    %v1141 = vpack.c.b16 %v836, %v835
    %v1142 = vpack.c.b16 %v838, %v837
    %v1143 = vpack.c.b16 %v840, %v839
    %v1144 = vpack.c.b16 %v842, %v841
    %v1145 = vpack.c.b16 %v844, %v843
    %v1146 = vpack.c.b16 %v846, %v845
    %v1147 = vpack.c.b16 %v848, %v847
    %v1148 = vpack.c.b16 %v850, %v849
    %v1149 = vpack.c.b16 %v852, %v851
    %v1150 = vpack.c.b16 %v854, %v853
    %v1151 = vpack.c.b16 %v856, %v855
    %v1152 = vpack.c.b16 %v858, %v857
    %v1153 = vpack.c.b16 %v860, %v859
    %v1154 = vpack.c.b16 %v862, %v861
    %v1155 = vpack.c.b16 %v864, %v863
    %v1156 = vpack.c.b16 %v866, %v865
    %v1157 = vpack.c.b16 %v868, %v867
    %v1158 = vpack.c.b16 %v870, %v869
    %v1159 = vpack.c.b16 %v872, %v871
    %v1160 = vpack.c.b16 %v874, %v873
    %v1161 = vpack.c.b16 %v876, %v875
    %v1162 = vpack.c.b16 %v878, %v877
    %v1163 = vpack.c.b16 %v880, %v879
    %v1164 = vpack.c.b16 %v882, %v881
    %v1165 = vpack.c.b16 %v884, %v883
    %v1166 = vpack.c.b16 %v886, %v885
    %v1167 = vpack.c.b16 %v888, %v887
    %v1168 = vpack.c.b16 %v890, %v889
    %v1169 = vpack.c.b16 %v892, %v891
    %v1170 = vpack.c.b16 %v894, %v893
    %v1171 = vpack.c.b16 %v896, %v895
    %v1172 = vpack.c.b16 %v898, %v897
    %v1173 = vpack.c.b16 %v900, %v899
    %v1174 = vpack.c.b16 %v902, %v901
    %v1175 = vpack.c.b16 %v904, %v903
    %v1176 = vpack.c.b16 %v906, %v905
    %v1177 = vpack.c.b16 %v908, %v907
    %v1178 = vpack.c.b16 %v910, %v909
    %v1179 = vpack.c.b16 %v912, %v911
    %v1180 = vpack.c.b16 %v914, %v913
    %v1181 = vpack.c.b16 %v916, %v915
    %v1182 = vpack.c.b16 %v918, %v917
    %v1183 = vpack.c.b16 %v920, %v919
    %v1184 = vpack.c.b16 %v922, %v921
    %v1185 = vpack.c.b16 %v924, %v923
    %v1186 = vpack.c.b16 %v926, %v925
    %v1187 = vpack.c.b16 %v928, %v927
    %v1188 = vpack.c.b16 %v930, %v929
    %v1189 = vpack.c.b16 %v932, %v931
    %v1190 = vpack.c.b16 %v934, %v933
    %v1191 = vpack.c.b16 %v936, %v935
    %v1192 = vpack.c.b16 %v938, %v937
    %v1193 = vpack.c.b16 %v940, %v939
    %v1194 = vpack.c.b16 %v942, %v941
    %v1195 = vpack.c.b16 %v944, %v943
    %v1196 = vpack.c.b16 %v946, %v945
    %v1197 = vpack.c.b16 %v948, %v947
    %v1198 = vpack.c.b16 %v950, %v949
    %v1199 = vpack.c.b16 %v952, %v951
    %v1200 = vpack.c.b16 %v954, %v953
    %v1201 = vpack.c.b16 %v956, %v955
    %v1202 = vpack.c.b16 %v958, %v957
    %v1203 = vpack.c.b16 %v960, %v959
    %v1204 = vpack.c.b16 %v962, %v961
    %v1205 = vpack.c.b16 %v964, %v963
    %v1206 = vpack.c.b16 %v966, %v965
    %v1207 = vpack.c.b16 %v968, %v967
    %v1208 = vpack.c.b16 %v970, %v969
    %v1209 = vpack.c.b16 %v972, %v971
    %v1210 = vpack.c.b16 %v974, %v973
    %v1211 = vpack.c.b16 %v976, %v975
    %v1212 = vpack.c.b16 %v978, %v977
    %v1213 = vpack.c.b16 %v980, %v979
    %v1214 = vpack.c.b16 %v982, %v981
    %v1215 = vpack.c.b16 %v984, %v983
    %v1216 = vpack.c.b16 %v986, %v985
    %v1217 = vpack.c.b16 %v988, %v987
    %v1218 = vpack.c.b16 %v990, %v989
    %v1219 = vpack.c.b16 %v992, %v991
    %v1220 = vpack.c.b16 %v994, %v993
    %v1221 = vpack.c.b16 %v996, %v995
    %v1222 = vpack.c.b16 %v998, %v997
    %v1223 = vpack.c.b16 %v1000, %v999
    %v1224 = vpack.c.b16 %v1002, %v1001
    %v1225 = vpack.c.b16 %v1004, %v1003
    %v1226 = vpack.c.b16 %v1006, %v1005
    %v1227 = vpack.c.b16 %v1008, %v1007
    %v1228 = vpack.c.b16 %v1010, %v1009
    %v1229 = vpack.c.b16 %v1012, %v1011
    %v1230 = vpack.c.b16 %v1014, %v1013
    %v1231 = vpack.c.b16 %v1016, %v1015
    %v1232 = vpack.c.b16 %v1018, %v1017
    %v1233 = vpack.c.b16 %v1020, %v1019
    %v1234 = vpack.c.b16 %v1022, %v1021
    %v1235 = vpack.c.b16 %v1024, %v1023
    %v1236 = vpack.c.b16 %v1026, %v1025
    %v1237 = vpack.c.b16 %v1028, %v1027
    %v1238 = vpack.c.b16 %v1030, %v1029
    %v1239 = vpack.c.b16 %v1032, %v1031
    %v1240 = vpack.c.b16 %v1034, %v1033
    %v1241 = vpack.c.b16 %v1036, %v1035
    %v1242 = vpack.c.b16 %v1038, %v1037
    %v1243 = vpack.c.b16 %v1040, %v1039
    %v1244 = vpack.c.b16 %v1042, %v1041
    %v1245 = vpack.c.b16 %v1044, %v1043
    %v1246 = vpack.c.b16 %v1046, %v1045
    %v1247 = vpack.c.b16 %v1048, %v1047
    %v1248 = vpack.c.b16 %v1050, %v1049
    %v1249 = vpack.c.b16 %v1052, %v1051
    %v1250 = vpack.c.b16 %v1054, %v1053
    %v1251 = vpack.c.b16 %v1056, %v1055
    %v1252 = vpack.c.b16 %v1058, %v1057
    %v1253 = vpack.c.b16 %v1060, %v1059
    %v1254 = vpack.c.b16 %v1062, %v1061
    %v1255 = vpack.c.b16 %v1064, %v1063
    %v1256 = vpack.c.b16 %v1066, %v1065
    %v1257 = vpack.c.b16 %v1068, %v1067
    %v1258 = vpack.c.b16 %v1070, %v1069
    %v1259 = vpack.c.b16 %v1072, %v1071
    %v1260 = vpack.c.b16 %v1074, %v1073
    %v1261 = vpack.c.b16 %v1076, %v1075
    %v1262 = vpack.c.b16 %v1078, %v1077
    %v1263 = vpack.c.b16 %v1080, %v1079
    %v1264 = vpack.c.b16 %v1082, %v1081
    %v1265 = vpack.c.b16 %v1084, %v1083
    %v1266 = vpack.c.b16 %v1086, %v1085
    %v1267 = vpack.c.b16 %v1088, %v1087
    %v1268 = vpack.c.b16 %v1090, %v1089
    %v1269 = vpack.c.b16 %v1092, %v1091
    %v1270 = vpack.c.b16 %v1094, %v1093
    %v1271 = vpack.c.b16 %v1096, %v1095
    %v1272 = vpack.c.b16 %v1098, %v1097
    %v1273 = vpack.c.b16 %v1100, %v1099
    %v1274 = vpack.c.b16 %v1102, %v1101
    %v1275 = vpack.c.b16 %v1104, %v1103
    %v1276 = vpack.c.b16 %v1106, %v1105
    %v1277 = vpack.c.b16 %v1108, %v1107
    %v1278 = vpack.c.b16 %v1110, %v1109
    %v1279 = vpack.c.b16 %v1112, %v1111
    %v1280 = vpack.c.b16 %v1114, %v1113
    %vm1446 = vcmask 736256
    %v1448 = vsel %vm1446, %v111, 0
    %vm1450 = vcmask 1044480
    %v1452 = vsel %vm1450, %v1280, 0
    %1454 = vmatprep.subr.bf16.mxu0 0
    %1455 = vmatpush1.bf16.msra.mxu0 %v1115
    %1456 = vmatprep.subr.bf16.mxu0 0
    %1457 = vmatpush1.bf16.msra.mxu0 %v1116
    %1458 = vmatprep.subr.bf16.mxu0 0
    %1459 = vmatpush1.bf16.msra.mxu0 %v1117
    %1460 = vmatprep.subr.bf16.mxu0 0
    %1461 = vmatpush1.bf16.msra.mxu0 %v1118
    %1462 = vmatprep.subr.bf16.mxu0 0
    %1463 = vmatpush1.bf16.msra.mxu0 %v1119
    %1464 = vmatprep.subr.bf16.mxu0 0
    %1465 = vmatpush1.bf16.msra.mxu0 %v1120
    %1466 = vmatprep.subr.bf16.mxu0 0
    %1467 = vmatpush1.bf16.msra.mxu0 %v1121
    %1468 = vmatprep.subr.bf16.mxu0 0
    %1469 = vmatpush1.bf16.msra.mxu0 %v1122
    %1470 = vmatprep.subr.bf16.mxu0 0
    %1471 = vmatpush1.bf16.msra.mxu0 %v1123
    %1472 = vmatprep.subr.bf16.mxu0 0
    %1473 = vmatpush1.bf16.msra.mxu0 %v1124
    %1474 = vmatprep.subr.bf16.mxu0 0
    %1475 = vmatpush1.bf16.msra.mxu0 %v1125
    %1476 = vmatprep.subr.bf16.mxu0 0
    %1477 = vmatpush1.bf16.msra.mxu0 %v1126
    %1478 = vmatprep.subr.bf16.mxu0 0
    %1479 = vmatpush1.bf16.msra.mxu0 %v1127
    %1480 = vmatprep.subr.bf16.mxu0 0
    %1481 = vmatpush1.bf16.msra.mxu0 %v1128
    %1482 = vmatprep.subr.bf16.mxu0 0
    %1483 = vmatpush1.bf16.msra.mxu0 %v1129
    %1484 = vmatprep.subr.bf16.mxu0 0
    %1485 = vmatpush1.bf16.msra.mxu0 %v1130
    %1486 = vmatprep.mubr.bf16.mxu0 %v92
    %1487 = vmatmul.mubr.bf16.gmra.mrb[0].mxu0 %v91
    %v1488 = vpop.f32.mrb[0].mxu0
    %v1489 = vadd.f32 %v449, %v1488
    %v1490 = vpop.f32.mrb[0].mxu0
    %v1491 = vpop.f32.mrb[0].mxu0
    %v1492 = vpop.f32.mrb[0].mxu0
    %1493 = vdwg.mxu0
    %1494 = vmatprep.subr.bf16.mxu0 0
    %1495 = vmatpush1.bf16.msra.mxu0 %v1131
    %1496 = vmatprep.subr.bf16.mxu0 0
    %1497 = vmatpush1.bf16.msra.mxu0 %v1132
    %1498 = vmatprep.subr.bf16.mxu0 0
    %1499 = vmatpush1.bf16.msra.mxu0 %v1133
    %1500 = vmatprep.subr.bf16.mxu0 0
    %1501 = vmatpush1.bf16.msra.mxu0 %v1134
    %1502 = vmatprep.subr.bf16.mxu0 0
    %1503 = vmatpush1.bf16.msra.mxu0 %v1135
    %1504 = vmatprep.subr.bf16.mxu0 0
    %1505 = vmatpush1.bf16.msra.mxu0 %v1136
    %1506 = vmatprep.subr.bf16.mxu0 0
    %1507 = vmatpush1.bf16.msra.mxu0 %v1137
    %1508 = vmatprep.subr.bf16.mxu0 0
    %1509 = vmatpush1.bf16.msra.mxu0 %v1138
    %1510 = vmatprep.subr.bf16.mxu0 0
    %1511 = vmatpush1.bf16.msra.mxu0 %v1139
    %1512 = vmatprep.subr.bf16.mxu0 0
    %1513 = vmatpush1.bf16.msra.mxu0 %v1140
    %1514 = vmatprep.subr.bf16.mxu0 0
    %1515 = vmatpush1.bf16.msra.mxu0 %v1141
    %1516 = vmatprep.subr.bf16.mxu0 0
    %1517 = vmatpush1.bf16.msra.mxu0 %v1142
    %1518 = vmatprep.subr.bf16.mxu0 0
    %1519 = vmatpush1.bf16.msra.mxu0 %v1143
    %1520 = vmatprep.subr.bf16.mxu0 0
    %1521 = vmatpush1.bf16.msra.mxu0 %v1144
    %1522 = vmatprep.subr.bf16.mxu0 0
    %1523 = vmatpush1.bf16.msra.mxu0 %v1145
    %1524 = vmatprep.subr.bf16.mxu0 0
    %1525 = vmatpush1.bf16.msra.mxu0 %v1146
    %1526 = vmatprep.mubr.bf16.mxu0 %v94
    %1527 = vmatmul.mubr.bf16.gmra.mrb[0].mxu0 %v93
    %v1528 = vpop.f32.mrb[0].mxu0
    %v1529 = vadd.f32 %v1489, %v1528
    %v1530 = vpop.f32.mrb[0].mxu0
    %v1531 = vpop.f32.mrb[0].mxu0
    %v1532 = vpop.f32.mrb[0].mxu0
    %1533 = vdwg.mxu0
    %1534 = vmatprep.subr.bf16.mxu0 0
    %1535 = vmatpush1.bf16.msra.mxu0 %v1147
    %1536 = vmatprep.subr.bf16.mxu0 0
    %1537 = vmatpush1.bf16.msra.mxu0 %v1148
    %1538 = vmatprep.subr.bf16.mxu0 0
    %1539 = vmatpush1.bf16.msra.mxu0 %v1149
    %1540 = vmatprep.subr.bf16.mxu0 0
    %1541 = vmatpush1.bf16.msra.mxu0 %v1150
    %1542 = vmatprep.subr.bf16.mxu0 0
    %1543 = vmatpush1.bf16.msra.mxu0 %v1151
    %1544 = vmatprep.subr.bf16.mxu0 0
    %1545 = vmatpush1.bf16.msra.mxu0 %v1152
    %1546 = vmatprep.subr.bf16.mxu0 0
    %1547 = vmatpush1.bf16.msra.mxu0 %v1153
    %1548 = vmatprep.subr.bf16.mxu0 0
    %1549 = vmatpush1.bf16.msra.mxu0 %v1154
    %1550 = vmatprep.subr.bf16.mxu0 0
    %1551 = vmatpush1.bf16.msra.mxu0 %v1155
    %1552 = vmatprep.subr.bf16.mxu0 0
    %1553 = vmatpush1.bf16.msra.mxu0 %v1156
    %1554 = vmatprep.subr.bf16.mxu0 0
    %1555 = vmatpush1.bf16.msra.mxu0 %v1157
    %1556 = vmatprep.subr.bf16.mxu0 0
    %1557 = vmatpush1.bf16.msra.mxu0 %v1158
    %1558 = vmatprep.subr.bf16.mxu0 0
    %1559 = vmatpush1.bf16.msra.mxu0 %v1159
    %1560 = vmatprep.subr.bf16.mxu0 0
    %1561 = vmatpush1.bf16.msra.mxu0 %v1160
    %1562 = vmatprep.subr.bf16.mxu0 0
    %1563 = vmatpush1.bf16.msra.mxu0 %v1161
    %1564 = vmatprep.subr.bf16.mxu0 0
    %1565 = vmatpush1.bf16.msra.mxu0 %v1162
    %1566 = vmatprep.mubr.bf16.mxu0 %v96
    %1567 = vmatmul.mubr.bf16.gmra.mrb[0].mxu0 %v95
    %v1568 = vpop.f32.mrb[0].mxu0
    %v1569 = vadd.f32 %v1529, %v1568
    %v1570 = vpop.f32.mrb[0].mxu0
    %v1571 = vpop.f32.mrb[0].mxu0
    %v1572 = vpop.f32.mrb[0].mxu0
    %1573 = vdwg.mxu0
    %1574 = vmatprep.subr.bf16.mxu0 0
    %1575 = vmatpush1.bf16.msra.mxu0 %v1163
    %1576 = vmatprep.subr.bf16.mxu0 0
    %1577 = vmatpush1.bf16.msra.mxu0 %v1164
    %1578 = vmatprep.subr.bf16.mxu0 0
    %1579 = vmatpush1.bf16.msra.mxu0 %v1165
    %1580 = vmatprep.subr.bf16.mxu0 0
    %1581 = vmatpush1.bf16.msra.mxu0 %v1166
    %1582 = vmatprep.subr.bf16.mxu0 0
    %1583 = vmatpush1.bf16.msra.mxu0 %v1167
    %1584 = vmatprep.subr.bf16.mxu0 0
    %1585 = vmatpush1.bf16.msra.mxu0 %v1168
    %1586 = vmatprep.subr.bf16.mxu0 0
    %1587 = vmatpush1.bf16.msra.mxu0 %v1169
    %1588 = vmatprep.subr.bf16.mxu0 0
    %1589 = vmatpush1.bf16.msra.mxu0 %v1170
    %1590 = vmatprep.subr.bf16.mxu0 0
    %1591 = vmatpush1.bf16.msra.mxu0 %v1171
    %1592 = vmatprep.subr.bf16.mxu0 0
    %1593 = vmatpush1.bf16.msra.mxu0 %v1172
    %1594 = vmatprep.subr.bf16.mxu0 0
    %1595 = vmatpush1.bf16.msra.mxu0 %v1173
    %1596 = vmatprep.subr.bf16.mxu0 0
    %1597 = vmatpush1.bf16.msra.mxu0 %v1174
    %1598 = vmatprep.subr.bf16.mxu0 0
    %1599 = vmatpush1.bf16.msra.mxu0 %v1175
    %1600 = vmatprep.subr.bf16.mxu0 0
    %1601 = vmatpush1.bf16.msra.mxu0 %v1176
    %1602 = vmatprep.subr.bf16.mxu0 0
    %1603 = vmatpush1.bf16.msra.mxu0 %v1177
    %1604 = vmatprep.subr.bf16.mxu0 0
    %1605 = vmatpush1.bf16.msra.mxu0 %v1178
    %1606 = vmatprep.mubr.bf16.mxu0 %v98
    %1607 = vmatmul.mubr.bf16.gmra.mrb[0].mxu0 %v97
    %v1608 = vpop.f32.mrb[0].mxu0
    %v1609 = vadd.f32 %v1569, %v1608
    %v1610 = vpop.f32.mrb[0].mxu0
    %v1611 = vpop.f32.mrb[0].mxu0
    %v1612 = vpop.f32.mrb[0].mxu0
    %1613 = vdwg.mxu0
    %1614 = vmatprep.subr.bf16.mxu0 0
    %1615 = vmatpush1.bf16.msra.mxu0 %v1179
    %1616 = vmatprep.subr.bf16.mxu0 0
    %1617 = vmatpush1.bf16.msra.mxu0 %v1180
    %1618 = vmatprep.subr.bf16.mxu0 0
    %1619 = vmatpush1.bf16.msra.mxu0 %v1181
    %1620 = vmatprep.subr.bf16.mxu0 0
    %1621 = vmatpush1.bf16.msra.mxu0 %v1182
    %1622 = vmatprep.subr.bf16.mxu0 0
    %1623 = vmatpush1.bf16.msra.mxu0 %v1183
    %1624 = vmatprep.subr.bf16.mxu0 0
    %1625 = vmatpush1.bf16.msra.mxu0 %v1184
    %1626 = vmatprep.subr.bf16.mxu0 0
    %1627 = vmatpush1.bf16.msra.mxu0 %v1185
    %1628 = vmatprep.subr.bf16.mxu0 0
    %1629 = vmatpush1.bf16.msra.mxu0 %v1186
    %1630 = vmatprep.subr.bf16.mxu0 0
    %1631 = vmatpush1.bf16.msra.mxu0 %v1187
    %1632 = vmatprep.subr.bf16.mxu0 0
    %1633 = vmatpush1.bf16.msra.mxu0 %v1188
    %1634 = vmatprep.subr.bf16.mxu0 0
    %1635 = vmatpush1.bf16.msra.mxu0 %v1189
    %1636 = vmatprep.subr.bf16.mxu0 0
    %1637 = vmatpush1.bf16.msra.mxu0 %v1190
    %1638 = vmatprep.subr.bf16.mxu0 0
    %1639 = vmatpush1.bf16.msra.mxu0 %v1191
    %1640 = vmatprep.subr.bf16.mxu0 0
    %1641 = vmatpush1.bf16.msra.mxu0 %v1192
    %1642 = vmatprep.subr.bf16.mxu0 0
    %1643 = vmatpush1.bf16.msra.mxu0 %v1193
    %1644 = vmatprep.subr.bf16.mxu0 0
    %1645 = vmatpush1.bf16.msra.mxu0 %v1194
    %1646 = vmatprep.mubr.bf16.mxu0 %v100
    %1647 = vmatmul.mubr.bf16.gmra.mrb[0].mxu0 %v99
    %v1648 = vpop.f32.mrb[0].mxu0
    %v1649 = vadd.f32 %v1609, %v1648
    %v1650 = vpop.f32.mrb[0].mxu0
    %v1651 = vpop.f32.mrb[0].mxu0
    %v1652 = vpop.f32.mrb[0].mxu0
    %1653 = vdwg.mxu0
    %1654 = vmatprep.subr.bf16.mxu0 0
    %1655 = vmatpush1.bf16.msra.mxu0 %v1195
    %1656 = vmatprep.subr.bf16.mxu0 0
    %1657 = vmatpush1.bf16.msra.mxu0 %v1196
    %1658 = vmatprep.subr.bf16.mxu0 0
    %1659 = vmatpush1.bf16.msra.mxu0 %v1197
    %1660 = vmatprep.subr.bf16.mxu0 0
    %1661 = vmatpush1.bf16.msra.mxu0 %v1198
    %1662 = vmatprep.subr.bf16.mxu0 0
    %1663 = vmatpush1.bf16.msra.mxu0 %v1199
    %1664 = vmatprep.subr.bf16.mxu0 0
    %1665 = vmatpush1.bf16.msra.mxu0 %v1200
    %1666 = vmatprep.subr.bf16.mxu0 0
    %1667 = vmatpush1.bf16.msra.mxu0 %v1201
    %1668 = vmatprep.subr.bf16.mxu0 0
    %1669 = vmatpush1.bf16.msra.mxu0 %v1202
    %1670 = vmatprep.subr.bf16.mxu0 0
    %1671 = vmatpush1.bf16.msra.mxu0 %v1203
    %1672 = vmatprep.subr.bf16.mxu0 0
    %1673 = vmatpush1.bf16.msra.mxu0 %v1204
    %1674 = vmatprep.subr.bf16.mxu0 0
    %1675 = vmatpush1.bf16.msra.mxu0 %v1205
    %1676 = vmatprep.subr.bf16.mxu0 0
    %1677 = vmatpush1.bf16.msra.mxu0 %v1206
    %1678 = vmatprep.subr.bf16.mxu0 0
    %1679 = vmatpush1.bf16.msra.mxu0 %v1207
    %1680 = vmatprep.subr.bf16.mxu0 0
    %1681 = vmatpush1.bf16.msra.mxu0 %v1208
    %1682 = vmatprep.subr.bf16.mxu0 0
    %1683 = vmatpush1.bf16.msra.mxu0 %v1209
    %1684 = vmatprep.subr.bf16.mxu0 0
    %1685 = vmatpush1.bf16.msra.mxu0 %v1210
    %1686 = vmatprep.mubr.bf16.mxu0 %v102
    %1687 = vmatmul.mubr.bf16.gmra.mrb[0].mxu0 %v101
    %v1688 = vpop.f32.mrb[0].mxu0
    %v1689 = vadd.f32 %v1649, %v1688
    %v1690 = vpop.f32.mrb[0].mxu0
    %v1691 = vpop.f32.mrb[0].mxu0
    %v1692 = vpop.f32.mrb[0].mxu0
    %1693 = vdwg.mxu0
    %1694 = vmatprep.subr.bf16.mxu0 0
    %1695 = vmatpush1.bf16.msra.mxu0 %v1211
    %1696 = vmatprep.subr.bf16.mxu0 0
    %1697 = vmatpush1.bf16.msra.mxu0 %v1212
    %1698 = vmatprep.subr.bf16.mxu0 0
    %1699 = vmatpush1.bf16.msra.mxu0 %v1213
    %1700 = vmatprep.subr.bf16.mxu0 0
    %1701 = vmatpush1.bf16.msra.mxu0 %v1214
    %1702 = vmatprep.subr.bf16.mxu0 0
    %1703 = vmatpush1.bf16.msra.mxu0 %v1215
    %1704 = vmatprep.subr.bf16.mxu0 0
    %1705 = vmatpush1.bf16.msra.mxu0 %v1216
    %1706 = vmatprep.subr.bf16.mxu0 0
    %1707 = vmatpush1.bf16.msra.mxu0 %v1217
    %1708 = vmatprep.subr.bf16.mxu0 0
    %1709 = vmatpush1.bf16.msra.mxu0 %v1218
    %1710 = vmatprep.subr.bf16.mxu0 0
    %1711 = vmatpush1.bf16.msra.mxu0 %v1219
    %1712 = vmatprep.subr.bf16.mxu0 0
    %1713 = vmatpush1.bf16.msra.mxu0 %v1220
    %1714 = vmatprep.subr.bf16.mxu0 0
    %1715 = vmatpush1.bf16.msra.mxu0 %v1221
    %1716 = vmatprep.subr.bf16.mxu0 0
    %1717 = vmatpush1.bf16.msra.mxu0 %v1222
    %1718 = vmatprep.subr.bf16.mxu0 0
    %1719 = vmatpush1.bf16.msra.mxu0 %v1223
    %1720 = vmatprep.subr.bf16.mxu0 0
    %1721 = vmatpush1.bf16.msra.mxu0 %v1224
    %1722 = vmatprep.subr.bf16.mxu0 0
    %1723 = vmatpush1.bf16.msra.mxu0 %v1225
    %1724 = vmatprep.subr.bf16.mxu0 0
    %1725 = vmatpush1.bf16.msra.mxu0 %v1226
    %1726 = vmatprep.mubr.bf16.mxu0 %v104
    %1727 = vmatmul.mubr.bf16.gmra.mrb[0].mxu0 %v103
    %v1728 = vpop.f32.mrb[0].mxu0
    %v1729 = vadd.f32 %v1689, %v1728
    %v1730 = vpop.f32.mrb[0].mxu0
    %v1731 = vpop.f32.mrb[0].mxu0
    %v1732 = vpop.f32.mrb[0].mxu0
    %1733 = vdwg.mxu0
    %1734 = vmatprep.subr.bf16.mxu0 0
    %1735 = vmatpush1.bf16.msra.mxu0 %v1227
    %1736 = vmatprep.subr.bf16.mxu0 0
    %1737 = vmatpush1.bf16.msra.mxu0 %v1228
    %1738 = vmatprep.subr.bf16.mxu0 0
    %1739 = vmatpush1.bf16.msra.mxu0 %v1229
    %1740 = vmatprep.subr.bf16.mxu0 0
    %1741 = vmatpush1.bf16.msra.mxu0 %v1230
    %1742 = vmatprep.subr.bf16.mxu0 0
    %1743 = vmatpush1.bf16.msra.mxu0 %v1231
    %1744 = vmatprep.subr.bf16.mxu0 0
    %1745 = vmatpush1.bf16.msra.mxu0 %v1232
    %1746 = vmatprep.subr.bf16.mxu0 0
    %1747 = vmatpush1.bf16.msra.mxu0 %v1233
    %1748 = vmatprep.subr.bf16.mxu0 0
    %1749 = vmatpush1.bf16.msra.mxu0 %v1234
    %1750 = vmatprep.subr.bf16.mxu0 0
    %1751 = vmatpush1.bf16.msra.mxu0 %v1235
    %1752 = vmatprep.subr.bf16.mxu0 0
    %1753 = vmatpush1.bf16.msra.mxu0 %v1236
    %1754 = vmatprep.subr.bf16.mxu0 0
    %1755 = vmatpush1.bf16.msra.mxu0 %v1237
    %1756 = vmatprep.subr.bf16.mxu0 0
    %1757 = vmatpush1.bf16.msra.mxu0 %v1238
    %1758 = vmatprep.subr.bf16.mxu0 0
    %1759 = vmatpush1.bf16.msra.mxu0 %v1239
    %1760 = vmatprep.subr.bf16.mxu0 0
    %1761 = vmatpush1.bf16.msra.mxu0 %v1240
    %1762 = vmatprep.subr.bf16.mxu0 0
    %1763 = vmatpush1.bf16.msra.mxu0 %v1241
    %1764 = vmatprep.subr.bf16.mxu0 0
    %1765 = vmatpush1.bf16.msra.mxu0 %v1242
    %1766 = vmatprep.mubr.bf16.mxu0 %v106
    %1767 = vmatmul.mubr.bf16.gmra.mrb[0].mxu0 %v105
    %v1768 = vpop.f32.mrb[0].mxu0
    %v1769 = vadd.f32 %v1729, %v1768
    %v1770 = vpop.f32.mrb[0].mxu0
    %v1771 = vpop.f32.mrb[0].mxu0
    %v1772 = vpop.f32.mrb[0].mxu0
    %1773 = vdwg.mxu0
    %1774 = vmatprep.subr.bf16.mxu0 0
    %1775 = vmatpush1.bf16.msra.mxu0 %v1243
    %1776 = vmatprep.subr.bf16.mxu0 0
    %1777 = vmatpush1.bf16.msra.mxu0 %v1244
    %1778 = vmatprep.subr.bf16.mxu0 0
    %1779 = vmatpush1.bf16.msra.mxu0 %v1245
    %1780 = vmatprep.subr.bf16.mxu0 0
    %1781 = vmatpush1.bf16.msra.mxu0 %v1246
    %1782 = vmatprep.subr.bf16.mxu0 0
    %1783 = vmatpush1.bf16.msra.mxu0 %v1247
    %1784 = vmatprep.subr.bf16.mxu0 0
    %1785 = vmatpush1.bf16.msra.mxu0 %v1248
    %1786 = vmatprep.subr.bf16.mxu0 0
    %1787 = vmatpush1.bf16.msra.mxu0 %v1249
    %1788 = vmatprep.subr.bf16.mxu0 0
    %1789 = vmatpush1.bf16.msra.mxu0 %v1250
    %1790 = vmatprep.subr.bf16.mxu0 0
    %1791 = vmatpush1.bf16.msra.mxu0 %v1251
    %1792 = vmatprep.subr.bf16.mxu0 0
    %1793 = vmatpush1.bf16.msra.mxu0 %v1252
    %1794 = vmatprep.subr.bf16.mxu0 0
    %1795 = vmatpush1.bf16.msra.mxu0 %v1253
    %1796 = vmatprep.subr.bf16.mxu0 0
    %1797 = vmatpush1.bf16.msra.mxu0 %v1254
    %1798 = vmatprep.subr.bf16.mxu0 0
    %1799 = vmatpush1.bf16.msra.mxu0 %v1255
    %1800 = vmatprep.subr.bf16.mxu0 0
    %1801 = vmatpush1.bf16.msra.mxu0 %v1256
    %1802 = vmatprep.subr.bf16.mxu0 0
    %1803 = vmatpush1.bf16.msra.mxu0 %v1257
    %1804 = vmatprep.subr.bf16.mxu0 0
    %1805 = vmatpush1.bf16.msra.mxu0 %v1258
    %1806 = vmatprep.mubr.bf16.mxu0 %v108
    %1807 = vmatmul.mubr.bf16.gmra.mrb[0].mxu0 %v107
    %v1808 = vpop.f32.mrb[0].mxu0
    %v1809 = vadd.f32 %v1769, %v1808
    %v1810 = vpop.f32.mrb[0].mxu0
    %v1811 = vpop.f32.mrb[0].mxu0
    %v1812 = vpop.f32.mrb[0].mxu0
    %1813 = vdwg.mxu0
    %1814 = vmatprep.subr.bf16.mxu0 0
    %1815 = vmatpush1.bf16.msra.mxu0 %v1259
    %1816 = vmatprep.subr.bf16.mxu0 0
    %1817 = vmatpush1.bf16.msra.mxu0 %v1260
    %1818 = vmatprep.subr.bf16.mxu0 0
    %1819 = vmatpush1.bf16.msra.mxu0 %v1261
    %1820 = vmatprep.subr.bf16.mxu0 0
    %1821 = vmatpush1.bf16.msra.mxu0 %v1262
    %1822 = vmatprep.subr.bf16.mxu0 0
    %1823 = vmatpush1.bf16.msra.mxu0 %v1263
    %1824 = vmatprep.subr.bf16.mxu0 0
    %1825 = vmatpush1.bf16.msra.mxu0 %v1264
    %1826 = vmatprep.subr.bf16.mxu0 0
    %1827 = vmatpush1.bf16.msra.mxu0 %v1265
    %1828 = vmatprep.subr.bf16.mxu0 0
    %1829 = vmatpush1.bf16.msra.mxu0 %v1266
    %1830 = vmatprep.subr.bf16.mxu0 0
    %1831 = vmatpush1.bf16.msra.mxu0 %v1267
    %1832 = vmatprep.subr.bf16.mxu0 0
    %1833 = vmatpush1.bf16.msra.mxu0 %v1268
    %1834 = vmatprep.subr.bf16.mxu0 0
    %1835 = vmatpush1.bf16.msra.mxu0 %v1269
    %1836 = vmatprep.subr.bf16.mxu0 0
    %1837 = vmatpush1.bf16.msra.mxu0 %v1270
    %1838 = vmatprep.subr.bf16.mxu0 0
    %1839 = vmatpush1.bf16.msra.mxu0 %v1271
    %1840 = vmatprep.subr.bf16.mxu0 0
    %1841 = vmatpush1.bf16.msra.mxu0 %v1272
    %1842 = vmatprep.subr.bf16.mxu0 0
    %1843 = vmatpush1.bf16.msra.mxu0 %v1273
    %1844 = vmatprep.subr.bf16.mxu0 0
    %1845 = vmatpush1.bf16.msra.mxu0 %v1274
    %1846 = vmatprep.mubr.bf16.mxu0 %v110
    %1847 = vmatmul.mubr.bf16.gmra.mrb[0].mxu0 %v109
    %v1848 = vpop.f32.mrb[0].mxu0
    %v1849 = vadd.f32 %v1809, %v1848
    %v1850 = vpop.f32.mrb[0].mxu0
    %v1851 = vpop.f32.mrb[0].mxu0
    %v1852 = vpop.f32.mrb[0].mxu0
    %1853 = vdwg.mxu0
    %1854 = vmatprep.subr.bf16.mxu0 0
    %1855 = vmatpush1.bf16.msra.mxu0 %v1275
    %1856 = vmatprep.subr.bf16.mxu0 0
    %1857 = vmatpush1.bf16.msra.mxu0 %v1276
    %1858 = vmatprep.subr.bf16.mxu0 0
    %1859 = vmatpush1.bf16.msra.mxu0 %v1277
    %1860 = vmatprep.subr.bf16.mxu0 0
    %1861 = vmatpush1.bf16.msra.mxu0 %v1278
    %1862 = vmatprep.subr.bf16.mxu0 0
    %1863 = vmatpush1.bf16.msra.mxu0 %v1279
    %1864 = vmatprep.subr.bf16.mxu0 0
    %1865 = vmatpush1.bf16.msra.mxu0 %v1452
    %1866 = vmatprep.subr.bf16.mxu0 0
    %1867 = vmatpush1.bf16.msra.mxu0 0
    %1868 = vmatprep.subr.bf16.mxu0 0
    %1869 = vmatpush1.bf16.msra.mxu0 0
    %1870 = vmatprep.subr.bf16.mxu0 0
    %1871 = vmatpush1.bf16.msra.mxu0 0
    %1872 = vmatprep.subr.bf16.mxu0 0
    %1873 = vmatpush1.bf16.msra.mxu0 0
    %1874 = vmatprep.subr.bf16.mxu0 0
    %1875 = vmatpush1.bf16.msra.mxu0 0
    %1876 = vmatprep.subr.bf16.mxu0 0
    %1877 = vmatpush1.bf16.msra.mxu0 0
    %1878 = vmatprep.subr.bf16.mxu0 0
    %1879 = vmatpush1.bf16.msra.mxu0 0
    %1880 = vmatprep.subr.bf16.mxu0 0
    %1881 = vmatpush1.bf16.msra.mxu0 0
    %1882 = vmatprep.subr.bf16.mxu0 0
    %1883 = vmatpush1.bf16.msra.mxu0 0
    %1884 = vmatprep.subr.bf16.mxu0 0
    %1885 = vmatpush1.bf16.msra.mxu0 0
    %1886 = vmatprep.mubr.bf16.mxu0 0
    %1887 = vmatmul.mubr.bf16.gmra.mrb[0].mxu0 %v1448
    %v1888 = vpop.f32.mrb[0].mxu0
    %v1889 = vadd.f32 %v1849, %v1888
    %v1890 = vpop.f32.mrb[0].mxu0
    %v1891 = vpop.f32.mrb[0].mxu0
    %v1892 = vpop.f32.mrb[0].mxu0
    %1893 = vdwg.mxu0
    %v1894 = vmax.f32 %v1889, 0.0
    %v1895 = vand.u32 2147483647, %v1889
    %v1896 = vsub.f32 0.0, %v1895
    %v1897 = vmul.f32 %v1896, 1.442695
    %v1898 = vpow.pop %v1897
    %v1899 = vadd.f32 %v1898, 1.0
    %v1900 = vlog2.pop %v1899
    %v1901 = vmul.f32 %v1900, 0.6931472
    %v1902 = vmul.f32 -0.5, %v1898
    %v1903 = vadd.f32 %v1902, 1.0
    %v1904 = vmul.f32 %v1903, %v1898
    %v1905 = vand.u32 2147483647, %v1898
    %vm1906 = vcmp.lt.f32.partialorder %v1905, 0.0004427343
    %v1907 = vsel %vm1906, %v1904, %v1901
    %v1908 = vadd.f32 %v1894, %v1907
    %v1909 = vld [vmem:[%s3] sm:$0xff]
    %v1910 = vld [vmem:[%s3 + $0x8] sm:$0xff]
    %v1911 = vld [vmem:[%s3 + $0x10] sm:$0xff]
    %v1912 = vld [vmem:[%s3 + $0x18] sm:$0xff]
    %v1913 = vld [vmem:[%s3 + $0x20] sm:$0xff]
    %v1914 = vld [vmem:[%s3 + $0x28] sm:$0xff]
    %v1915 = vld [vmem:[%s3 + $0x30] sm:$0xff]
    %v1916 = vld [vmem:[%s3 + $0x38] sm:$0xff]
    %v1917 = vld [vmem:[%s3 + $0x40] sm:$0xff]
    %v1918 = vld [vmem:[%s3 + $0x48] sm:$0xff]
    %v1919 = vld [vmem:[%s3 + $0x50] sm:$0xff]
    %v1920 = vld [vmem:[%s3 + $0x58] sm:$0xff]
    %v1921 = vld [vmem:[%s3 + $0x60] sm:$0xff]
    %v1922 = vld [vmem:[%s3 + $0x68] sm:$0xff]
    %v1923 = vld [vmem:[%s3 + $0x70] sm:$0xff]
    %v1924 = vld [vmem:[%s3 + $0x78] sm:$0xff]
    %v1925 = vld [vmem:[%s4] sm:$0x1]
    %v1927 = vlaneseq
    %v1928 = vshrl.u32 %v1927, 7
    %v1929 = vsub.s32 0, %v1928
    %v1930 = vrot.slane %v1925, %v1929
    %1932 = vmatprep.subr.mxu0 0.0
    %1933 = vmatpush1.msra.mxu0 %v1909
    %1934 = vmatprep.subr.mxu0 0.0
    %1935 = vmatpush1.msra.mxu0 %v1910
    %1936 = vmatprep.subr.mxu0 0.0
    %1937 = vmatpush1.msra.mxu0 %v1911
    %1938 = vmatprep.subr.mxu0 0.0
    %1939 = vmatpush1.msra.mxu0 %v1912
    %1940 = vmatprep.subr.mxu0 0.0
    %1941 = vmatpush1.msra.mxu0 %v1913
    %1942 = vmatprep.subr.mxu0 0.0
    %1943 = vmatpush1.msra.mxu0 %v1914
    %1944 = vmatprep.subr.mxu0 0.0
    %1945 = vmatpush1.msra.mxu0 %v1915
    %1946 = vmatprep.subr.mxu0 0.0
    %1947 = vmatpush1.msra.mxu0 %v1916
    %1948 = vmatprep.subr.mxu0 0.0
    %1949 = vmatpush1.msra.mxu0 %v1917
    %1950 = vmatprep.subr.mxu0 0.0
    %1951 = vmatpush1.msra.mxu0 %v1918
    %1952 = vmatprep.subr.mxu0 0.0
    %1953 = vmatpush1.msra.mxu0 %v1919
    %1954 = vmatprep.subr.mxu0 0.0
    %1955 = vmatpush1.msra.mxu0 %v1920
    %1956 = vmatprep.subr.mxu0 0.0
    %1957 = vmatpush1.msra.mxu0 %v1921
    %1958 = vmatprep.subr.mxu0 0.0
    %1959 = vmatpush1.msra.mxu0 %v1922
    %1960 = vmatprep.subr.mxu0 0.0
    %1961 = vmatpush1.msra.mxu0 %v1923
    %1962 = vmatprep.subr.mxu0 0.0
    %1963 = vmatpush1.msra.mxu0 %v1924
    %1964 = vmatprep.subr.mxu0 0.0
    %1965 = vmatpush1.msra.mxu0 0.0
    %1966 = vmatprep.subr.mxu0 0.0
    %1967 = vmatpush1.msra.mxu0 0.0
    %1968 = vmatprep.subr.mxu0 0.0
    %1969 = vmatpush1.msra.mxu0 0.0
    %1970 = vmatprep.subr.mxu0 0.0
    %1971 = vmatpush1.msra.mxu0 0.0
    %1972 = vmatprep.subr.mxu0 0.0
    %1973 = vmatpush1.msra.mxu0 0.0
    %1974 = vmatprep.subr.mxu0 0.0
    %1975 = vmatpush1.msra.mxu0 0.0
    %1976 = vmatprep.subr.mxu0 0.0
    %1977 = vmatpush1.msra.mxu0 0.0
    %1978 = vmatprep.subr.mxu0 0.0
    %1979 = vmatpush1.msra.mxu0 0.0
    %1980 = vmatprep.subr.mxu0 0.0
    %1981 = vmatpush1.msra.mxu0 0.0
    %1982 = vmatprep.subr.mxu0 0.0
    %1983 = vmatpush1.msra.mxu0 0.0
    %1984 = vmatprep.subr.mxu0 0.0
    %1985 = vmatpush1.msra.mxu0 0.0
    %1986 = vmatprep.subr.mxu0 0.0
    %1987 = vmatpush1.msra.mxu0 0.0
    %1988 = vmatprep.subr.mxu0 0.0
    %1989 = vmatpush1.msra.mxu0 0.0
    %1990 = vmatprep.subr.mxu0 0.0
    %1991 = vmatpush1.msra.mxu0 0.0
    %1992 = vmatprep.subr.mxu0 0.0
    %1993 = vmatpush1.msra.mxu0 0.0
    %1994 = vmatprep.subr.mxu0 0.0
    %1995 = vmatpush1.msra.mxu0 0.0
    %1996 = vmatprep.mubr.f32.mxu0 0.0
    %1997 = vmatmul.mubr.f32.gmra.mrb[0].mxu0 %v1908
    %v1998 = vpop.f32.mrb[0].mxu0
    %v1999 = vadd.f32 %v1930, %v1998
    %v2000 = vpop.f32.mrb[0].mxu0
    %2001 = vdwg.mxu0
    %v2002 = vmax.f32 %v1999, 0.0
    %v2003 = vand.u32 2147483647, %v1999
    %v2004 = vsub.f32 0.0, %v2003
    %v2005 = vmul.f32 %v2004, 1.442695
    %v2006 = vpow.pop %v2005
    %v2007 = vadd.f32 %v2006, 1.0
    %v2008 = vlog2.pop %v2007
    %v2009 = vmul.f32 %v2008, 0.6931472
    %v2010 = vmul.f32 -0.5, %v2006
    %v2011 = vadd.f32 %v2010, 1.0
    %v2012 = vmul.f32 %v2011, %v2006
    %v2013 = vand.u32 2147483647, %v2006
    %vm2014 = vcmp.lt.f32.partialorder %v2013, 0.0004427343
    %v2015 = vsel %vm2014, %v2012, %v2009
    %v2016 = vadd.f32 %v2002, %v2015
    %v2017 = vld [vmem:[%s5] sm:$0xff]
    %v2018 = vld [vmem:[%s5 + $0x8] sm:$0xff]
    %v2019 = vld [vmem:[%s5 + $0x10] sm:$0xff]
    %v2020 = vld [vmem:[%s5 + $0x18] sm:$0xff]
    %v2021 = vld [vmem:[%s5 + $0x20] sm:$0xff]
    %v2022 = vld [vmem:[%s5 + $0x28] sm:$0xff]
    %v2023 = vld [vmem:[%s5 + $0x30] sm:$0xff]
    %v2024 = vld [vmem:[%s5 + $0x38] sm:$0xff]
    %v2025 = vld [vmem:[%s5 + $0x40] sm:$0xff]
    %v2026 = vld [vmem:[%s5 + $0x48] sm:$0xff]
    %v2027 = vld [vmem:[%s5 + $0x50] sm:$0xff]
    %v2028 = vld [vmem:[%s5 + $0x58] sm:$0xff]
    %v2029 = vld [vmem:[%s5 + $0x60] sm:$0xff]
    %v2030 = vld [vmem:[%s5 + $0x68] sm:$0xff]
    %v2031 = vld [vmem:[%s5 + $0x70] sm:$0xff]
    %v2032 = vld [vmem:[%s5 + $0x78] sm:$0xff]
    %v2033 = vld [vmem:[%s6] sm:$0x1]
    %v2035 = vlaneseq
    %v2036 = vshrl.u32 %v2035, 7
    %v2037 = vsub.s32 0, %v2036
    %v2038 = vrot.slane %v2033, %v2037
    %2040 = vmatprep.subr.mxu0 0.0
    %2041 = vmatpush1.msra.mxu0 %v2017
    %2042 = vmatprep.subr.mxu0 0.0
    %2043 = vmatpush1.msra.mxu0 %v2018
    %2044 = vmatprep.subr.mxu0 0.0
    %2045 = vmatpush1.msra.mxu0 %v2019
    %2046 = vmatprep.subr.mxu0 0.0
    %2047 = vmatpush1.msra.mxu0 %v2020
    %2048 = vmatprep.subr.mxu0 0.0
    %2049 = vmatpush1.msra.mxu0 %v2021
    %2050 = vmatprep.subr.mxu0 0.0
    %2051 = vmatpush1.msra.mxu0 %v2022
    %2052 = vmatprep.subr.mxu0 0.0
    %2053 = vmatpush1.msra.mxu0 %v2023
    %2054 = vmatprep.subr.mxu0 0.0
    %2055 = vmatpush1.msra.mxu0 %v2024
    %2056 = vmatprep.subr.mxu0 0.0
    %2057 = vmatpush1.msra.mxu0 %v2025
    %2058 = vmatprep.subr.mxu0 0.0
    %2059 = vmatpush1.msra.mxu0 %v2026
    %2060 = vmatprep.subr.mxu0 0.0
    %2061 = vmatpush1.msra.mxu0 %v2027
    %2062 = vmatprep.subr.mxu0 0.0
    %2063 = vmatpush1.msra.mxu0 %v2028
    %2064 = vmatprep.subr.mxu0 0.0
    %2065 = vmatpush1.msra.mxu0 %v2029
    %2066 = vmatprep.subr.mxu0 0.0
    %2067 = vmatpush1.msra.mxu0 %v2030
    %2068 = vmatprep.subr.mxu0 0.0
    %2069 = vmatpush1.msra.mxu0 %v2031
    %2070 = vmatprep.subr.mxu0 0.0
    %2071 = vmatpush1.msra.mxu0 %v2032
    %2072 = vmatprep.subr.mxu0 0.0
    %2073 = vmatpush1.msra.mxu0 0.0
    %2074 = vmatprep.subr.mxu0 0.0
    %2075 = vmatpush1.msra.mxu0 0.0
    %2076 = vmatprep.subr.mxu0 0.0
    %2077 = vmatpush1.msra.mxu0 0.0
    %2078 = vmatprep.subr.mxu0 0.0
    %2079 = vmatpush1.msra.mxu0 0.0
    %2080 = vmatprep.subr.mxu0 0.0
    %2081 = vmatpush1.msra.mxu0 0.0
    %2082 = vmatprep.subr.mxu0 0.0
    %2083 = vmatpush1.msra.mxu0 0.0
    %2084 = vmatprep.subr.mxu0 0.0
    %2085 = vmatpush1.msra.mxu0 0.0
    %2086 = vmatprep.subr.mxu0 0.0
    %2087 = vmatpush1.msra.mxu0 0.0
    %2088 = vmatprep.subr.mxu0 0.0
    %2089 = vmatpush1.msra.mxu0 0.0
    %2090 = vmatprep.subr.mxu0 0.0
    %2091 = vmatpush1.msra.mxu0 0.0
    %2092 = vmatprep.subr.mxu0 0.0
    %2093 = vmatpush1.msra.mxu0 0.0
    %2094 = vmatprep.subr.mxu0 0.0
    %2095 = vmatpush1.msra.mxu0 0.0
    %2096 = vmatprep.subr.mxu0 0.0
    %2097 = vmatpush1.msra.mxu0 0.0
    %2098 = vmatprep.subr.mxu0 0.0
    %2099 = vmatpush1.msra.mxu0 0.0
    %2100 = vmatprep.subr.mxu0 0.0
    %2101 = vmatpush1.msra.mxu0 0.0
    %2102 = vmatprep.subr.mxu0 0.0
    %2103 = vmatpush1.msra.mxu0 0.0
    %2104 = vmatprep.mubr.f32.mxu0 0.0
    %2105 = vmatmul.mubr.f32.gmra.mrb[0].mxu0 %v2016
    %v2106 = vpop.f32.mrb[0].mxu0
    %v2107 = vadd.f32 %v2038, %v2106
    %v2108 = vpop.f32.mrb[0].mxu0
    %2109 = vdwg.mxu0
    %v2110 = vtanh.pop %v2107
    %v2111 = vsub.f32 %v2107, %v2110
    %v2112 = vld [vmem:[%s7] sm:$0xff]
    %v2113 = vld [vmem:[%s7 + $0x8] sm:$0xff]
    %v2114 = vld [vmem:[%s7 + $0x10] sm:$0xff]
    %v2115 = vld [vmem:[%s7 + $0x18] sm:$0xff]
    %v2116 = vld [vmem:[%s7 + $0x20] sm:$0xff]
    %v2117 = vld [vmem:[%s7 + $0x28] sm:$0xff]
    %v2118 = vld [vmem:[%s7 + $0x30] sm:$0xff]
    %v2119 = vld [vmem:[%s7 + $0x38] sm:$0xff]
    %v2120 = vld [vmem:[%s8] sm:$0x1]
    %v2122 = vlaneseq
    %v2123 = vshrl.u32 %v2122, 7
    %v2124 = vsub.s32 0, %v2123
    %v2125 = vrot.slane %v2120, %v2124
    %vm2127 = vcmask 523264
    %v2129 = vsel %vm2127, %v2111, 0
    %2131 = vmatprep.subr.mxu0 0.0
    %2132 = vmatpush1.msra.mxu0 %v2112
    %2133 = vmatprep.subr.mxu0 0.0
    %2134 = vmatpush1.msra.mxu0 %v2113
    %2135 = vmatprep.subr.mxu0 0.0
    %2136 = vmatpush1.msra.mxu0 %v2114
    %2137 = vmatprep.subr.mxu0 0.0
    %2138 = vmatpush1.msra.mxu0 %v2115
    %2139 = vmatprep.subr.mxu0 0.0
    %2140 = vmatpush1.msra.mxu0 %v2116
    %2141 = vmatprep.subr.mxu0 0.0
    %2142 = vmatpush1.msra.mxu0 %v2117
    %2143 = vmatprep.subr.mxu0 0.0
    %2144 = vmatpush1.msra.mxu0 %v2118
    %2145 = vmatprep.subr.mxu0 0.0
    %2146 = vmatpush1.msra.mxu0 %v2119
    %2147 = vmatprep.subr.mxu0 0.0
    %2148 = vmatpush1.msra.mxu0 0.0
    %2149 = vmatprep.subr.mxu0 0.0
    %2150 = vmatpush1.msra.mxu0 0.0
    %2151 = vmatprep.subr.mxu0 0.0
    %2152 = vmatpush1.msra.mxu0 0.0
    %2153 = vmatprep.subr.mxu0 0.0
    %2154 = vmatpush1.msra.mxu0 0.0
    %2155 = vmatprep.subr.mxu0 0.0
    %2156 = vmatpush1.msra.mxu0 0.0
    %2157 = vmatprep.subr.mxu0 0.0
    %2158 = vmatpush1.msra.mxu0 0.0
    %2159 = vmatprep.subr.mxu0 0.0
    %2160 = vmatpush1.msra.mxu0 0.0
    %2161 = vmatprep.subr.mxu0 0.0
    %2162 = vmatpush1.msra.mxu0 0.0
    %2163 = vmatprep.subr.mxu0 0.0
    %2164 = vmatpush1.msra.mxu0 0.0
    %2165 = vmatprep.subr.mxu0 0.0
    %2166 = vmatpush1.msra.mxu0 0.0
    %2167 = vmatprep.subr.mxu0 0.0
    %2168 = vmatpush1.msra.mxu0 0.0
    %2169 = vmatprep.subr.mxu0 0.0
    %2170 = vmatpush1.msra.mxu0 0.0
    %2171 = vmatprep.subr.mxu0 0.0
    %2172 = vmatpush1.msra.mxu0 0.0
    %2173 = vmatprep.subr.mxu0 0.0
    %2174 = vmatpush1.msra.mxu0 0.0
    %2175 = vmatprep.subr.mxu0 0.0
    %2176 = vmatpush1.msra.mxu0 0.0
    %2177 = vmatprep.subr.mxu0 0.0
    %2178 = vmatpush1.msra.mxu0 0.0
    %2179 = vmatprep.subr.mxu0 0.0
    %2180 = vmatpush1.msra.mxu0 0.0
    %2181 = vmatprep.subr.mxu0 0.0
    %2182 = vmatpush1.msra.mxu0 0.0
    %2183 = vmatprep.subr.mxu0 0.0
    %2184 = vmatpush1.msra.mxu0 0.0
    %2185 = vmatprep.subr.mxu0 0.0
    %2186 = vmatpush1.msra.mxu0 0.0
    %2187 = vmatprep.subr.mxu0 0.0
    %2188 = vmatpush1.msra.mxu0 0.0
    %2189 = vmatprep.subr.mxu0 0.0
    %2190 = vmatpush1.msra.mxu0 0.0
    %2191 = vmatprep.subr.mxu0 0.0
    %2192 = vmatpush1.msra.mxu0 0.0
    %2193 = vmatprep.subr.mxu0 0.0
    %2194 = vmatpush1.msra.mxu0 0.0
    %2195 = vmatprep.mubr.f32.mxu0 0.0
    %2196 = vmatmul.mubr.f32.gmra.mrb[0].mxu0 %v2129
    %v2197 = vpop.f32.mrb[0].mxu0
    %v2198 = vadd.f32 %v2125, %v2197
    %v2199 = vpop.f32.mrb[0].mxu0
    %2200 = vdwg.mxu0
    %v2201 = vxor.u32 %v2198, 2147483648
    %v2202 = vmul.f32 %v2201, 1.442695
    %v2203 = vpow.pop %v2202
    %v2204 = vadd.f32 %v2203, 1.0
    %v2205 = vrcp.pop %v2204
    %v2206 = vmul.f32 1.0, %v2205
    %v2207 = vld [vmem:[%s9] sm:$0x1]
    %v2209 = vlaneseq
    %v2210 = vshrl.u32 %v2209, 7
    %v2211 = vsub.s32 0, %v2210
    %v2212 = vrot.slane %v2207, %v2211
    %v2214 = vmul.f32 %v2206, %v2212
    %vm2215 = vcmask 27648
    %v2216 = vsel %vm2215, %v2214, 0.0
    %2217 = vadd.xlane.f32.xlu0 %v2216
    %v2218 = vpop.xlane.xlu0 %2217
    %vm2219 = vcmask 3072
    %2220 = vst.msk [vmem:[%s10] sm:$0xf] %vm2219, %v2218
    // Predicated region
    $region46: #{energy_latency6_50_forward.1} parent=1 // pred_check
      _
    $region47: #{energy_latency6_50_forward.1} parent=1 // pred_check_branch
      %2222 = sbr.rel (0) target = $region49
    $region48: #{energy_latency6_50_forward.1} parent=1 // pred_region
      _
    $region49: #{energy_latency6_50_forward.1} parent=1 // pred_fallthru
      _
    // Predicated region
    $region50: #{energy_latency6_50_forward.1} parent=1 // pred_check
      _
    $region51: #{energy_latency6_50_forward.1} parent=1 // pred_check_branch
      %2224 = sbr.rel (0) target = $region53
    $region52: #{energy_latency6_50_forward.1} parent=1 // pred_region
      _
    $region53: #{energy_latency6_50_forward.1} parent=1 // pred_fallthru
      _
    %2225 = vsyncpa [#allocation3], 1

</llo_original>
